<compile_context>
chip_gen: v6e
topology: v6e:2x2x1
jax: 0.10.0
libtpu: 0.0.40
codegen_flags: <defaults>
</compile_context>

<pallas_src>
import jax
import jax.numpy as jnp
import numpy as np
from jax import lax
from jax.experimental import pallas as pl
from jax.experimental.pallas import tpu as pltpu


def encoder_kernel(tok_ref, emb_ref, w_ih_t_ref, w_hh_t_ref, b_ref, outs_ref):
    seq_len, hidden = outs_ref.shape
    vocab = emb_ref.shape[0]

    # ---------- one-time input projection (off the recurrent critical path) ----------
    # One-hot gather fused into the gates_x GEMM:
    #   gates_x = onehot @ (emb @ W_ih^T) + bias          (S, 4H)
    tok = tok_ref[...]                                                   # (S, 1) int32
    vocab_iota = lax.broadcasted_iota(jnp.int32, (seq_len, vocab), 1)    # (S, V)
    onehot = (vocab_iota == tok).astype(jnp.float32)                     # (S, V)
    emb_proj = jnp.dot(emb_ref[...], w_ih_t_ref[...],
                       preferred_element_type=jnp.float32)               # (V, 4H)
    gates_x = jnp.dot(onehot, emb_proj,
                      preferred_element_type=jnp.float32) + b_ref[...]   # (S, 4H)

    # ---------- fully-unrolled recurrence (S is small & static) ----------
    # TODO(synk): for long sequences, chunk S via a grid axis marked "arbitrary"
    #             (h/c carried in VMEM scratch) instead of a full Python unroll.
    h = jnp.zeros((1, hidden), jnp.float32)
    c = jnp.zeros((1, hidden), jnp.float32)

    for t in range(seq_len):
        # One (1,H)@(H,4H) matmul per step on the serial path; W_hh^T is only 4 vregs.
        gates = gates_x[t:t + 1, :] + jnp.dot(
            h, w_hh_t_ref[...], preferred_element_type=jnp.float32)      # (1, 4H)
        # Fused EUP launches: sigmoid over the contiguous i|f slice; o-gate sigmoid
        # issued before the c-chain so it overlaps the i/f/g -> c dependency chain.
        if_g = jax.nn.sigmoid(gates[:, 0:2 * hidden])                    # i | f together
        o_g = jax.nn.sigmoid(gates[:, 3 * hidden:4 * hidden])
        g_g = jnp.tanh(gates[:, 2 * hidden:3 * hidden])
        c = if_g[:, hidden:2 * hidden] * c + if_g[:, 0:hidden] * g_g
        h = o_g * jnp.tanh(c)
        outs_ref[pl.ds(t, 1), :] = h                                     # static row store

def encoder_forward(tokens, emb_table, w_ih, w_hh, b_ih, b_hh):
    """Returns (h_final (1, H), encoder_outputs (S, H)) — same as the torch forward."""
    seq_len = tokens.shape[0]
    vocab, hidden = emb_table.shape

    # PyTorch LSTMCell layout: W_* is (4H, H), gate order i, f, g, o (kept contiguous).
    w_ih_t = jnp.transpose(w_ih).astype(jnp.float32)                  # (H, 4H)
    w_hh_t = jnp.transpose(w_hh).astype(jnp.float32)                  # (H, 4H)
    bias = (b_ih + b_hh).astype(jnp.float32).reshape(1, 4 * hidden)   # (1, 4H)
    tok2d = tokens.astype(jnp.int32).reshape(seq_len, 1)              # (S, 1)

    # TODO(synk): for production vocab sizes on v7x (64 MiB VMEM), keep the embedding
    #             table in HBM (memory_space=pl.ANY) and DMA only the needed rows;
    #             at this toy size the whole table comfortably lives in VMEM.
    # TODO(synk): if run over a batch of independent sequences, add a leading batch
    #             grid axis with dimension_semantics=("parallel",) to use both v7x TCs.
    outs = pl.pallas_call(
        encoder_kernel,
        out_shape=jax.ShapeDtypeStruct((seq_len, hidden), jnp.float32),
        in_specs=[
            pl.BlockSpec(memory_space=pltpu.MemorySpace.VMEM),   # token ids (S, 1)
            pl.BlockSpec(memory_space=pltpu.MemorySpace.VMEM),   # embedding table (V, H)
            pl.BlockSpec(memory_space=pltpu.MemorySpace.VMEM),   # W_ih^T (H, 4H)
            pl.BlockSpec(memory_space=pltpu.MemorySpace.VMEM),   # W_hh^T (H, 4H)
            pl.BlockSpec(memory_space=pltpu.MemorySpace.VMEM),   # bias (1, 4H)
        ],
        out_specs=pl.BlockSpec(memory_space=pltpu.MemorySpace.VMEM),
    )(tok2d, emb_table.astype(jnp.float32), w_ih_t, w_hh_t, bias)

    # h_final is identical to the last encoder output row.
    return outs[seq_len - 1:seq_len, :], outs


def encoder_reference(tokens, emb_table, w_ih, w_hh, b_ih, b_hh):
    """Pure-JAX reference replicating torch nn.Embedding + nn.LSTMCell semantics."""
    hidden = emb_table.shape[1]

    def step(carry, tok):
        h, c = carry
        x_t = emb_table[tok].reshape(1, hidden)
        gates = x_t @ w_ih.T + b_ih + h @ w_hh.T + b_hh
        i_g = jax.nn.sigmoid(gates[:, 0 * hidden:1 * hidden])
        f_g = jax.nn.sigmoid(gates[:, 1 * hidden:2 * hidden])
        g_g = jnp.tanh(gates[:, 2 * hidden:3 * hidden])
        o_g = jax.nn.sigmoid(gates[:, 3 * hidden:4 * hidden])
        c_new = f_g * c + i_g * g_g
        h_new = o_g * jnp.tanh(c_new)
        return (h_new, c_new), h_new[0]

    h0 = jnp.zeros((1, hidden), jnp.float32)
    c0 = jnp.zeros((1, hidden), jnp.float32)
    (h_fin, _), outs = lax.scan(step, (h0, c0), tokens)
    return h_fin, outs


if __name__ == "__main__":
    input_size = 32       # word-vector / hidden size
    vocab_size = 16
    seq_len = 8

    key = jax.random.PRNGKey(0)
    k_tok, k_emb, k_wih, k_whh, k_bih, k_bhh = jax.random.split(key, 6)

    tokens = jax.random.randint(k_tok, (seq_len,), 0, vocab_size, dtype=jnp.int32)

    # nn.Embedding: N(0, 1); nn.LSTMCell: U(-1/sqrt(H), 1/sqrt(H))
    emb_table = jax.random.normal(k_emb, (vocab_size, input_size), jnp.float32)
    bound = 1.0 / np.sqrt(input_size)
    w_ih = jax.random.uniform(k_wih, (4 * input_size, input_size), jnp.float32, -bound, bound)
    w_hh = jax.random.uniform(k_whh, (4 * input_size, input_size), jnp.float32, -bound, bound)
    b_ih = jax.random.uniform(k_bih, (4 * input_size,), jnp.float32, -bound, bound)
    b_hh = jax.random.uniform(k_bhh, (4 * input_size,), jnp.float32, -bound, bound)

    h_fin, enc_outs = encoder_forward(tokens, emb_table, w_ih, w_hh, b_ih, b_hh)
    jax.block_until_ready((h_fin, enc_outs))

    h_ref, outs_ref = encoder_reference(tokens, emb_table, w_ih, w_hh, b_ih, b_hh)

    assert h_fin.shape == (1, input_size)
    assert enc_outs.shape == (seq_len, input_size)
    np.testing.assert_allclose(np.asarray(h_fin), np.asarray(h_ref), atol=1e-5, rtol=1e-5)
    np.testing.assert_allclose(np.asarray(enc_outs), np.asarray(outs_ref), atol=1e-5, rtol=1e-5)

    print("KERNEL_OK")
</pallas_src>

<mosaic_0001>
module attributes {stable_mosaic.version = 11 : i64} {
  func.func @encoder_kernel(%arg0: memref<8x1xi32, #tpu.memory_space<vmem>>, %arg1: memref<16x32xf32, #tpu.memory_space<vmem>>, %arg2: memref<32x128xf32, #tpu.memory_space<vmem>>, %arg3: memref<32x128xf32, #tpu.memory_space<vmem>>, %arg4: memref<1x128xf32, #tpu.memory_space<vmem>>, %arg5: memref<8x32xf32, #tpu.memory_space<vmem>>) attributes {dimension_semantics = [], scalar_prefetch = 0 : i64, scratch_operands = 0 : i64, tpu.core_type = #tpu.core_type<tc>} {
    %c0 = arith.constant 0 : index
    %c0_0 = arith.constant 0 : index
    %0 = vector.load %arg0[%c0, %c0_0] : memref<8x1xi32, #tpu.memory_space<vmem>>, vector<8x1xi32>
    %1 = tpu.iota {dimensions = array<i32: 1>} : vector<8x16xi32>
    %2 = vector.broadcast %0 : vector<8x1xi32> to vector<8x16xi32>
    %3 = arith.cmpi eq, %1, %2 : vector<8x16xi32>
    %4 = arith.extui %3 : vector<8x16xi1> to vector<8x16xi32>
    %5 = arith.sitofp %4 : vector<8x16xi32> to vector<8x16xf32>
    %c0_1 = arith.constant 0 : index
    %c0_2 = arith.constant 0 : index
    %6 = vector.load %arg1[%c0_1, %c0_2] : memref<16x32xf32, #tpu.memory_space<vmem>>, vector<16x32xf32>
    %c0_3 = arith.constant 0 : index
    %c0_4 = arith.constant 0 : index
    %7 = vector.load %arg2[%c0_3, %c0_4] : memref<32x128xf32, #tpu.memory_space<vmem>>, vector<32x128xf32>
    %cst = arith.constant dense<0.000000e+00> : vector<16x128xf32>
    %8 = tpu.matmul %6, %7, %cst {dimension_numbers = #tpu.dot_dimension_numbers<[1], [0], [0], [1], [0, 0, 1, 1], [], []>} : vector<16x32xf32>, vector<32x128xf32>, vector<16x128xf32> -> vector<16x128xf32>
    %cst_5 = arith.constant dense<0.000000e+00> : vector<8x128xf32>
    %9 = tpu.matmul %5, %8, %cst_5 {dimension_numbers = #tpu.dot_dimension_numbers<[1], [0], [0], [1], [0, 0, 1, 1], [], []>} : vector<8x16xf32>, vector<16x128xf32>, vector<8x128xf32> -> vector<8x128xf32>
    %c0_6 = arith.constant 0 : index
    %c0_7 = arith.constant 0 : index
    %10 = vector.load %arg4[%c0_6, %c0_7] : memref<1x128xf32, #tpu.memory_space<vmem>>, vector<1x128xf32>
    %11 = vector.broadcast %10 : vector<1x128xf32> to vector<8x128xf32>
    %12 = arith.addf %9, %11 : vector<8x128xf32>
    %cst_8 = arith.constant 0.000000e+00 : f32
    %13 = vector.broadcast %cst_8 : f32 to vector<1x32xf32>
    %cst_9 = arith.constant 0.000000e+00 : f32
    %14 = vector.broadcast %cst_9 : f32 to vector<1x32xf32>
    %15 = vector.extract_strided_slice %12 {offsets = [0, 0], sizes = [1, 128], strides = [1, 1]} : vector<8x128xf32> to vector<1x128xf32>
    %c0_10 = arith.constant 0 : index
    %c0_11 = arith.constant 0 : index
    %16 = vector.load %arg3[%c0_10, %c0_11] : memref<32x128xf32, #tpu.memory_space<vmem>>, vector<32x128xf32>
    %cst_12 = arith.constant dense<0.000000e+00> : vector<1x128xf32>
    %17 = tpu.matmul %13, %16, %cst_12 {dimension_numbers = #tpu.dot_dimension_numbers<[1], [0], [0], [1], [0, 0, 1, 1], [], []>} : vector<1x32xf32>, vector<32x128xf32>, vector<1x128xf32> -> vector<1x128xf32>
    %18 = arith.addf %15, %17 : vector<1x128xf32>
    %19 = vector.extract_strided_slice %18 {offsets = [0, 0], sizes = [1, 64], strides = [1, 1]} : vector<1x128xf32> to vector<1x64xf32>
    %20 = arith.negf %19 : vector<1x64xf32>
    %21 = math.exp %20 : vector<1x64xf32>
    %cst_13 = arith.constant 1.000000e+00 : f32
    %22 = vector.broadcast %cst_13 : f32 to vector<1x64xf32>
    %23 = arith.addf %22, %21 : vector<1x64xf32>
    %24 = arith.divf %22, %23 : vector<1x64xf32>
    %25 = vector.extract_strided_slice %18 {offsets = [0, 96], sizes = [1, 32], strides = [1, 1]} : vector<1x128xf32> to vector<1x32xf32>
    %26 = arith.negf %25 : vector<1x32xf32>
    %27 = math.exp %26 : vector<1x32xf32>
    %cst_14 = arith.constant 1.000000e+00 : f32
    %28 = vector.broadcast %cst_14 : f32 to vector<1x32xf32>
    %29 = arith.addf %28, %27 : vector<1x32xf32>
    %30 = arith.divf %28, %29 : vector<1x32xf32>
    %31 = vector.extract_strided_slice %18 {offsets = [0, 64], sizes = [1, 32], strides = [1, 1]} : vector<1x128xf32> to vector<1x32xf32>
    %32 = math.tanh %31 : vector<1x32xf32>
    %33 = vector.extract_strided_slice %24 {offsets = [0, 32], sizes = [1, 32], strides = [1, 1]} : vector<1x64xf32> to vector<1x32xf32>
    %34 = arith.mulf %33, %14 : vector<1x32xf32>
    %35 = vector.extract_strided_slice %24 {offsets = [0, 0], sizes = [1, 32], strides = [1, 1]} : vector<1x64xf32> to vector<1x32xf32>
    %36 = arith.mulf %35, %32 : vector<1x32xf32>
    %37 = arith.addf %34, %36 : vector<1x32xf32>
    %38 = math.tanh %37 : vector<1x32xf32>
    %39 = arith.mulf %30, %38 : vector<1x32xf32>
    %c0_15 = arith.constant 0 : index
    %c0_16 = arith.constant 0 : index
    %40 = vector.load %arg5[%c0_15, %c0_16] : memref<8x32xf32, #tpu.memory_space<vmem>>, vector<1x32xf32>
    tpu.vector_store %arg5[%c0_15, %c0_16], %39 {strides = array<i32>} : memref<8x32xf32, #tpu.memory_space<vmem>>, vector<1x32xf32>,
    %41 = vector.extract_strided_slice %12 {offsets = [1, 0], sizes = [1, 128], strides = [1, 1]} : vector<8x128xf32> to vector<1x128xf32>
    %c0_17 = arith.constant 0 : index
    %c0_18 = arith.constant 0 : index
    %42 = vector.load %arg3[%c0_17, %c0_18] : memref<32x128xf32, #tpu.memory_space<vmem>>, vector<32x128xf32>
    %cst_19 = arith.constant dense<0.000000e+00> : vector<1x128xf32>
    %43 = tpu.matmul %39, %42, %cst_19 {dimension_numbers = #tpu.dot_dimension_numbers<[1], [0], [0], [1], [0, 0, 1, 1], [], []>} : vector<1x32xf32>, vector<32x128xf32>, vector<1x128xf32> -> vector<1x128xf32>
    %44 = arith.addf %41, %43 : vector<1x128xf32>
    %45 = vector.extract_strided_slice %44 {offsets = [0, 0], sizes = [1, 64], strides = [1, 1]} : vector<1x128xf32> to vector<1x64xf32>
    %46 = arith.negf %45 : vector<1x64xf32>
    %47 = math.exp %46 : vector<1x64xf32>
    %cst_20 = arith.constant 1.000000e+00 : f32
    %48 = vector.broadcast %cst_20 : f32 to vector<1x64xf32>
    %49 = arith.addf %48, %47 : vector<1x64xf32>
    %50 = arith.divf %48, %49 : vector<1x64xf32>
    %51 = vector.extract_strided_slice %44 {offsets = [0, 96], sizes = [1, 32], strides = [1, 1]} : vector<1x128xf32> to vector<1x32xf32>
    %52 = arith.negf %51 : vector<1x32xf32>
    %53 = math.exp %52 : vector<1x32xf32>
    %cst_21 = arith.constant 1.000000e+00 : f32
    %54 = vector.broadcast %cst_21 : f32 to vector<1x32xf32>
    %55 = arith.addf %54, %53 : vector<1x32xf32>
    %56 = arith.divf %54, %55 : vector<1x32xf32>
    %57 = vector.extract_strided_slice %44 {offsets = [0, 64], sizes = [1, 32], strides = [1, 1]} : vector<1x128xf32> to vector<1x32xf32>
    %58 = math.tanh %57 : vector<1x32xf32>
    %59 = vector.extract_strided_slice %50 {offsets = [0, 32], sizes = [1, 32], strides = [1, 1]} : vector<1x64xf32> to vector<1x32xf32>
    %60 = arith.mulf %59, %37 : vector<1x32xf32>
    %61 = vector.extract_strided_slice %50 {offsets = [0, 0], sizes = [1, 32], strides = [1, 1]} : vector<1x64xf32> to vector<1x32xf32>
    %62 = arith.mulf %61, %58 : vector<1x32xf32>
    %63 = arith.addf %60, %62 : vector<1x32xf32>
    %64 = math.tanh %63 : vector<1x32xf32>
    %65 = arith.mulf %56, %64 : vector<1x32xf32>
    %c1 = arith.constant 1 : index
    %c0_22 = arith.constant 0 : index
    %66 = vector.load %arg5[%c1, %c0_22] : memref<8x32xf32, #tpu.memory_space<vmem>>, vector<1x32xf32>
    tpu.vector_store %arg5[%c1, %c0_22], %65 {strides = array<i32>} : memref<8x32xf32, #tpu.memory_space<vmem>>, vector<1x32xf32>,
    %67 = vector.extract_strided_slice %12 {offsets = [2, 0], sizes = [1, 128], strides = [1, 1]} : vector<8x128xf32> to vector<1x128xf32>
    %c0_23 = arith.constant 0 : index
    %c0_24 = arith.constant 0 : index
    %68 = vector.load %arg3[%c0_23, %c0_24] : memref<32x128xf32, #tpu.memory_space<vmem>>, vector<32x128xf32>
    %cst_25 = arith.constant dense<0.000000e+00> : vector<1x128xf32>
    %69 = tpu.matmul %65, %68, %cst_25 {dimension_numbers = #tpu.dot_dimension_numbers<[1], [0], [0], [1], [0, 0, 1, 1], [], []>} : vector<1x32xf32>, vector<32x128xf32>, vector<1x128xf32> -> vector<1x128xf32>
    %70 = arith.addf %67, %69 : vector<1x128xf32>
    %71 = vector.extract_strided_slice %70 {offsets = [0, 0], sizes = [1, 64], strides = [1, 1]} : vector<1x128xf32> to vector<1x64xf32>
    %72 = arith.negf %71 : vector<1x64xf32>
    %73 = math.exp %72 : vector<1x64xf32>
    %cst_26 = arith.constant 1.000000e+00 : f32
    %74 = vector.broadcast %cst_26 : f32 to vector<1x64xf32>
    %75 = arith.addf %74, %73 : vector<1x64xf32>
    %76 = arith.divf %74, %75 : vector<1x64xf32>
    %77 = vector.extract_strided_slice %70 {offsets = [0, 96], sizes = [1, 32], strides = [1, 1]} : vector<1x128xf32> to vector<1x32xf32>
    %78 = arith.negf %77 : vector<1x32xf32>
    %79 = math.exp %78 : vector<1x32xf32>
    %cst_27 = arith.constant 1.000000e+00 : f32
    %80 = vector.broadcast %cst_27 : f32 to vector<1x32xf32>
    %81 = arith.addf %80, %79 : vector<1x32xf32>
    %82 = arith.divf %80, %81 : vector<1x32xf32>
    %83 = vector.extract_strided_slice %70 {offsets = [0, 64], sizes = [1, 32], strides = [1, 1]} : vector<1x128xf32> to vector<1x32xf32>
    %84 = math.tanh %83 : vector<1x32xf32>
    %85 = vector.extract_strided_slice %76 {offsets = [0, 32], sizes = [1, 32], strides = [1, 1]} : vector<1x64xf32> to vector<1x32xf32>
    %86 = arith.mulf %85, %63 : vector<1x32xf32>
    %87 = vector.extract_strided_slice %76 {offsets = [0, 0], sizes = [1, 32], strides = [1, 1]} : vector<1x64xf32> to vector<1x32xf32>
    %88 = arith.mulf %87, %84 : vector<1x32xf32>
    %89 = arith.addf %86, %88 : vector<1x32xf32>
    %90 = math.tanh %89 : vector<1x32xf32>
    %91 = arith.mulf %82, %90 : vector<1x32xf32>
    %c2 = arith.constant 2 : index
    %c0_28 = arith.constant 0 : index
    %92 = vector.load %arg5[%c2, %c0_28] : memref<8x32xf32, #tpu.memory_space<vmem>>, vector<1x32xf32>
    tpu.vector_store %arg5[%c2, %c0_28], %91 {strides = array<i32>} : memref<8x32xf32, #tpu.memory_space<vmem>>, vector<1x32xf32>,
    %93 = vector.extract_strided_slice %12 {offsets = [3, 0], sizes = [1, 128], strides = [1, 1]} : vector<8x128xf32> to vector<1x128xf32>
    %c0_29 = arith.constant 0 : index
    %c0_30 = arith.constant 0 : index
    %94 = vector.load %arg3[%c0_29, %c0_30] : memref<32x128xf32, #tpu.memory_space<vmem>>, vector<32x128xf32>
    %cst_31 = arith.constant dense<0.000000e+00> : vector<1x128xf32>
    %95 = tpu.matmul %91, %94, %cst_31 {dimension_numbers = #tpu.dot_dimension_numbers<[1], [0], [0], [1], [0, 0, 1, 1], [], []>} : vector<1x32xf32>, vector<32x128xf32>, vector<1x128xf32> -> vector<1x128xf32>
    %96 = arith.addf %93, %95 : vector<1x128xf32>
    %97 = vector.extract_strided_slice %96 {offsets = [0, 0], sizes = [1, 64], strides = [1, 1]} : vector<1x128xf32> to vector<1x64xf32>
    %98 = arith.negf %97 : vector<1x64xf32>
    %99 = math.exp %98 : vector<1x64xf32>
    %cst_32 = arith.constant 1.000000e+00 : f32
    %100 = vector.broadcast %cst_32 : f32 to vector<1x64xf32>
    %101 = arith.addf %100, %99 : vector<1x64xf32>
    %102 = arith.divf %100, %101 : vector<1x64xf32>
    %103 = vector.extract_strided_slice %96 {offsets = [0, 96], sizes = [1, 32], strides = [1, 1]} : vector<1x128xf32> to vector<1x32xf32>
    %104 = arith.negf %103 : vector<1x32xf32>
    %105 = math.exp %104 : vector<1x32xf32>
    %cst_33 = arith.constant 1.000000e+00 : f32
    %106 = vector.broadcast %cst_33 : f32 to vector<1x32xf32>
    %107 = arith.addf %106, %105 : vector<1x32xf32>
    %108 = arith.divf %106, %107 : vector<1x32xf32>
    %109 = vector.extract_strided_slice %96 {offsets = [0, 64], sizes = [1, 32], strides = [1, 1]} : vector<1x128xf32> to vector<1x32xf32>
    %110 = math.tanh %109 : vector<1x32xf32>
    %111 = vector.extract_strided_slice %102 {offsets = [0, 32], sizes = [1, 32], strides = [1, 1]} : vector<1x64xf32> to vector<1x32xf32>
    %112 = arith.mulf %111, %89 : vector<1x32xf32>
    %113 = vector.extract_strided_slice %102 {offsets = [0, 0], sizes = [1, 32], strides = [1, 1]} : vector<1x64xf32> to vector<1x32xf32>
    %114 = arith.mulf %113, %110 : vector<1x32xf32>
    %115 = arith.addf %112, %114 : vector<1x32xf32>
    %116 = math.tanh %115 : vector<1x32xf32>
    %117 = arith.mulf %108, %116 : vector<1x32xf32>
    %c3 = arith.constant 3 : index
    %c0_34 = arith.constant 0 : index
    %118 = vector.load %arg5[%c3, %c0_34] : memref<8x32xf32, #tpu.memory_space<vmem>>, vector<1x32xf32>
    tpu.vector_store %arg5[%c3, %c0_34], %117 {strides = array<i32>} : memref<8x32xf32, #tpu.memory_space<vmem>>, vector<1x32xf32>,
    %119 = vector.extract_strided_slice %12 {offsets = [4, 0], sizes = [1, 128], strides = [1, 1]} : vector<8x128xf32> to vector<1x128xf32>
    %c0_35 = arith.constant 0 : index
    %c0_36 = arith.constant 0 : index
    %120 = vector.load %arg3[%c0_35, %c0_36] : memref<32x128xf32, #tpu.memory_space<vmem>>, vector<32x128xf32>
    %cst_37 = arith.constant dense<0.000000e+00> : vector<1x128xf32>
    %121 = tpu.matmul %117, %120, %cst_37 {dimension_numbers = #tpu.dot_dimension_numbers<[1], [0], [0], [1], [0, 0, 1, 1], [], []>} : vector<1x32xf32>, vector<32x128xf32>, vector<1x128xf32> -> vector<1x128xf32>
    %122 = arith.addf %119, %121 : vector<1x128xf32>
    %123 = vector.extract_strided_slice %122 {offsets = [0, 0], sizes = [1, 64], strides = [1, 1]} : vector<1x128xf32> to vector<1x64xf32>
    %124 = arith.negf %123 : vector<1x64xf32>
    %125 = math.exp %124 : vector<1x64xf32>
    %cst_38 = arith.constant 1.000000e+00 : f32
    %126 = vector.broadcast %cst_38 : f32 to vector<1x64xf32>
    %127 = arith.addf %126, %125 : vector<1x64xf32>
    %128 = arith.divf %126, %127 : vector<1x64xf32>
    %129 = vector.extract_strided_slice %122 {offsets = [0, 96], sizes = [1, 32], strides = [1, 1]} : vector<1x128xf32> to vector<1x32xf32>
    %130 = arith.negf %129 : vector<1x32xf32>
    %131 = math.exp %130 : vector<1x32xf32>
    %cst_39 = arith.constant 1.000000e+00 : f32
    %132 = vector.broadcast %cst_39 : f32 to vector<1x32xf32>
    %133 = arith.addf %132, %131 : vector<1x32xf32>
    %134 = arith.divf %132, %133 : vector<1x32xf32>
    %135 = vector.extract_strided_slice %122 {offsets = [0, 64], sizes = [1, 32], strides = [1, 1]} : vector<1x128xf32> to vector<1x32xf32>
    %136 = math.tanh %135 : vector<1x32xf32>
    %137 = vector.extract_strided_slice %128 {offsets = [0, 32], sizes = [1, 32], strides = [1, 1]} : vector<1x64xf32> to vector<1x32xf32>
    %138 = arith.mulf %137, %115 : vector<1x32xf32>
    %139 = vector.extract_strided_slice %128 {offsets = [0, 0], sizes = [1, 32], strides = [1, 1]} : vector<1x64xf32> to vector<1x32xf32>
    %140 = arith.mulf %139, %136 : vector<1x32xf32>
    %141 = arith.addf %138, %140 : vector<1x32xf32>
    %142 = math.tanh %141 : vector<1x32xf32>
    %143 = arith.mulf %134, %142 : vector<1x32xf32>
    %c4 = arith.constant 4 : index
    %c0_40 = arith.constant 0 : index
    %144 = vector.load %arg5[%c4, %c0_40] : memref<8x32xf32, #tpu.memory_space<vmem>>, vector<1x32xf32>
    tpu.vector_store %arg5[%c4, %c0_40], %143 {strides = array<i32>} : memref<8x32xf32, #tpu.memory_space<vmem>>, vector<1x32xf32>,
    %145 = vector.extract_strided_slice %12 {offsets = [5, 0], sizes = [1, 128], strides = [1, 1]} : vector<8x128xf32> to vector<1x128xf32>
    %c0_41 = arith.constant 0 : index
    %c0_42 = arith.constant 0 : index
    %146 = vector.load %arg3[%c0_41, %c0_42] : memref<32x128xf32, #tpu.memory_space<vmem>>, vector<32x128xf32>
    %cst_43 = arith.constant dense<0.000000e+00> : vector<1x128xf32>
    %147 = tpu.matmul %143, %146, %cst_43 {dimension_numbers = #tpu.dot_dimension_numbers<[1], [0], [0], [1], [0, 0, 1, 1], [], []>} : vector<1x32xf32>, vector<32x128xf32>, vector<1x128xf32> -> vector<1x128xf32>
    %148 = arith.addf %145, %147 : vector<1x128xf32>
    %149 = vector.extract_strided_slice %148 {offsets = [0, 0], sizes = [1, 64], strides = [1, 1]} : vector<1x128xf32> to vector<1x64xf32>
    %150 = arith.negf %149 : vector<1x64xf32>
    %151 = math.exp %150 : vector<1x64xf32>
    %cst_44 = arith.constant 1.000000e+00 : f32
    %152 = vector.broadcast %cst_44 : f32 to vector<1x64xf32>
    %153 = arith.addf %152, %151 : vector<1x64xf32>
    %154 = arith.divf %152, %153 : vector<1x64xf32>
    %155 = vector.extract_strided_slice %148 {offsets = [0, 96], sizes = [1, 32], strides = [1, 1]} : vector<1x128xf32> to vector<1x32xf32>
    %156 = arith.negf %155 : vector<1x32xf32>
    %157 = math.exp %156 : vector<1x32xf32>
    %cst_45 = arith.constant 1.000000e+00 : f32
    %158 = vector.broadcast %cst_45 : f32 to vector<1x32xf32>
    %159 = arith.addf %158, %157 : vector<1x32xf32>
    %160 = arith.divf %158, %159 : vector<1x32xf32>
    %161 = vector.extract_strided_slice %148 {offsets = [0, 64], sizes = [1, 32], strides = [1, 1]} : vector<1x128xf32> to vector<1x32xf32>
    %162 = math.tanh %161 : vector<1x32xf32>
    %163 = vector.extract_strided_slice %154 {offsets = [0, 32], sizes = [1, 32], strides = [1, 1]} : vector<1x64xf32> to vector<1x32xf32>
    %164 = arith.mulf %163, %141 : vector<1x32xf32>
    %165 = vector.extract_strided_slice %154 {offsets = [0, 0], sizes = [1, 32], strides = [1, 1]} : vector<1x64xf32> to vector<1x32xf32>
    %166 = arith.mulf %165, %162 : vector<1x32xf32>
    %167 = arith.addf %164, %166 : vector<1x32xf32>
    %168 = math.tanh %167 : vector<1x32xf32>
    %169 = arith.mulf %160, %168 : vector<1x32xf32>
    %c5 = arith.constant 5 : index
    %c0_46 = arith.constant 0 : index
    %170 = vector.load %arg5[%c5, %c0_46] : memref<8x32xf32, #tpu.memory_space<vmem>>, vector<1x32xf32>
    tpu.vector_store %arg5[%c5, %c0_46], %169 {strides = array<i32>} : memref<8x32xf32, #tpu.memory_space<vmem>>, vector<1x32xf32>,
    %171 = vector.extract_strided_slice %12 {offsets = [6, 0], sizes = [1, 128], strides = [1, 1]} : vector<8x128xf32> to vector<1x128xf32>
    %c0_47 = arith.constant 0 : index
    %c0_48 = arith.constant 0 : index
    %172 = vector.load %arg3[%c0_47, %c0_48] : memref<32x128xf32, #tpu.memory_space<vmem>>, vector<32x128xf32>
    %cst_49 = arith.constant dense<0.000000e+00> : vector<1x128xf32>
    %173 = tpu.matmul %169, %172, %cst_49 {dimension_numbers = #tpu.dot_dimension_numbers<[1], [0], [0], [1], [0, 0, 1, 1], [], []>} : vector<1x32xf32>, vector<32x128xf32>, vector<1x128xf32> -> vector<1x128xf32>
    %174 = arith.addf %171, %173 : vector<1x128xf32>
    %175 = vector.extract_strided_slice %174 {offsets = [0, 0], sizes = [1, 64], strides = [1, 1]} : vector<1x128xf32> to vector<1x64xf32>
    %176 = arith.negf %175 : vector<1x64xf32>
    %177 = math.exp %176 : vector<1x64xf32>
    %cst_50 = arith.constant 1.000000e+00 : f32
    %178 = vector.broadcast %cst_50 : f32 to vector<1x64xf32>
    %179 = arith.addf %178, %177 : vector<1x64xf32>
    %180 = arith.divf %178, %179 : vector<1x64xf32>
    %181 = vector.extract_strided_slice %174 {offsets = [0, 96], sizes = [1, 32], strides = [1, 1]} : vector<1x128xf32> to vector<1x32xf32>
    %182 = arith.negf %181 : vector<1x32xf32>
    %183 = math.exp %182 : vector<1x32xf32>
    %cst_51 = arith.constant 1.000000e+00 : f32
    %184 = vector.broadcast %cst_51 : f32 to vector<1x32xf32>
    %185 = arith.addf %184, %183 : vector<1x32xf32>
    %186 = arith.divf %184, %185 : vector<1x32xf32>
    %187 = vector.extract_strided_slice %174 {offsets = [0, 64], sizes = [1, 32], strides = [1, 1]} : vector<1x128xf32> to vector<1x32xf32>
    %188 = math.tanh %187 : vector<1x32xf32>
    %189 = vector.extract_strided_slice %180 {offsets = [0, 32], sizes = [1, 32], strides = [1, 1]} : vector<1x64xf32> to vector<1x32xf32>
    %190 = arith.mulf %189, %167 : vector<1x32xf32>
    %191 = vector.extract_strided_slice %180 {offsets = [0, 0], sizes = [1, 32], strides = [1, 1]} : vector<1x64xf32> to vector<1x32xf32>
    %192 = arith.mulf %191, %188 : vector<1x32xf32>
    %193 = arith.addf %190, %192 : vector<1x32xf32>
    %194 = math.tanh %193 : vector<1x32xf32>
    %195 = arith.mulf %186, %194 : vector<1x32xf32>
    %c6 = arith.constant 6 : index
    %c0_52 = arith.constant 0 : index
    %196 = vector.load %arg5[%c6, %c0_52] : memref<8x32xf32, #tpu.memory_space<vmem>>, vector<1x32xf32>
    tpu.vector_store %arg5[%c6, %c0_52], %195 {strides = array<i32>} : memref<8x32xf32, #tpu.memory_space<vmem>>, vector<1x32xf32>,
    %197 = vector.extract_strided_slice %12 {offsets = [7, 0], sizes = [1, 128], strides = [1, 1]} : vector<8x128xf32> to vector<1x128xf32>
    %c0_53 = arith.constant 0 : index
    %c0_54 = arith.constant 0 : index
    %198 = vector.load %arg3[%c0_53, %c0_54] : memref<32x128xf32, #tpu.memory_space<vmem>>, vector<32x128xf32>
    %cst_55 = arith.constant dense<0.000000e+00> : vector<1x128xf32>
    %199 = tpu.matmul %195, %198, %cst_55 {dimension_numbers = #tpu.dot_dimension_numbers<[1], [0], [0], [1], [0, 0, 1, 1], [], []>} : vector<1x32xf32>, vector<32x128xf32>, vector<1x128xf32> -> vector<1x128xf32>
    %200 = arith.addf %197, %199 : vector<1x128xf32>
    %201 = vector.extract_strided_slice %200 {offsets = [0, 0], sizes = [1, 64], strides = [1, 1]} : vector<1x128xf32> to vector<1x64xf32>
    %202 = arith.negf %201 : vector<1x64xf32>
    %203 = math.exp %202 : vector<1x64xf32>
    %cst_56 = arith.constant 1.000000e+00 : f32
    %204 = vector.broadcast %cst_56 : f32 to vector<1x64xf32>
    %205 = arith.addf %204, %203 : vector<1x64xf32>
    %206 = arith.divf %204, %205 : vector<1x64xf32>
    %207 = vector.extract_strided_slice %200 {offsets = [0, 96], sizes = [1, 32], strides = [1, 1]} : vector<1x128xf32> to vector<1x32xf32>
    %208 = arith.negf %207 : vector<1x32xf32>
    %209 = math.exp %208 : vector<1x32xf32>
    %cst_57 = arith.constant 1.000000e+00 : f32
    %210 = vector.broadcast %cst_57 : f32 to vector<1x32xf32>
    %211 = arith.addf %210, %209 : vector<1x32xf32>
    %212 = arith.divf %210, %211 : vector<1x32xf32>
    %213 = vector.extract_strided_slice %200 {offsets = [0, 64], sizes = [1, 32], strides = [1, 1]} : vector<1x128xf32> to vector<1x32xf32>
    %214 = math.tanh %213 : vector<1x32xf32>
    %215 = vector.extract_strided_slice %206 {offsets = [0, 32], sizes = [1, 32], strides = [1, 1]} : vector<1x64xf32> to vector<1x32xf32>
    %216 = arith.mulf %215, %193 : vector<1x32xf32>
    %217 = vector.extract_strided_slice %206 {offsets = [0, 0], sizes = [1, 32], strides = [1, 1]} : vector<1x64xf32> to vector<1x32xf32>
    %218 = arith.mulf %217, %214 : vector<1x32xf32>
    %219 = arith.addf %216, %218 : vector<1x32xf32>
    %220 = math.tanh %219 : vector<1x32xf32>
    %221 = arith.mulf %212, %220 : vector<1x32xf32>
    %c7 = arith.constant 7 : index
    %c0_58 = arith.constant 0 : index
    %222 = vector.load %arg5[%c7, %c0_58] : memref<8x32xf32, #tpu.memory_space<vmem>>, vector<1x32xf32>
    tpu.vector_store %arg5[%c7, %c0_58], %221 {strides = array<i32>} : memref<8x32xf32, #tpu.memory_space<vmem>>, vector<1x32xf32>,
    return
  }
}

</mosaic_0001>

<llo_original>
// kernel: tpu_custom_call.1
$region0: #{tpu_custom_call.1}
  #allocation0 [shape = 'u32[]', space=smem, size = 0x4, offset = 0x4, fixed_abs, tag = 'smem constant byte address 0x4 - core index']
  #allocation1 [shape = 'u32[144,128]{1,0:T(1,128)}', space=vmem, size = 0x12000, scoped, tag = 'internal scratch']
  %s0 = inlined_call_operand.vmem [shape: s32[8,1], index: 0, kind: input, shape index: {}]
  %s1 = inlined_call_operand.hbm [shape: f32[16,32], index: 1, kind: input, shape index: {}]
  %s2 = inlined_call_operand.hbm [shape: f32[32,128], index: 2, kind: input, shape index: {}]
  %s3 = inlined_call_operand.hbm [shape: f32[32,128], index: 3, kind: input, shape index: {}]
  %s4 = inlined_call_operand.vmem [shape: f32[1,128], index: 4, kind: input, shape index: {}]
  %s5 = inlined_call_operand.hbm [shape: f32[8,32], index: 5, kind: output, shape index: {}]
  %s6 = sld [smem:[#allocation0]]
  $region42: #{tpu_custom_call.1} parent=0
    _
  %s8 = ssub.s32 1, %s6
  %s9 = scalar_select 0, %s8, %s6
  $region1: #{tpu_custom_call.1} parent=0
    #allocation2 [shape = 'u8[8192]{0}', space=vmem, size = 0x2000, scoped, tag = 'input window, operand 1, single buffered']
    #allocation3 [shape = 's32[1]{0}', space=sflag, size = 0x4, scoped, tag = 'scoped memory for tpu_custom_call.1']
    #allocation4 [shape = 's32[1]{0}', space=sflag, size = 0x4, scoped, tag = 'scoped memory for tpu_custom_call.1']
    #allocation5 [shape = 'u8[16384]{0}', space=vmem, size = 0x4000, scoped, tag = 'input window, operand 2, single buffered']
    #allocation6 [shape = 's32[1]{0}', space=sflag, size = 0x4, scoped, tag = 'scoped memory for tpu_custom_call.1']
    #allocation7 [shape = 'u8[16384]{0}', space=vmem, size = 0x4000, scoped, tag = 'input window, operand 3, single buffered']
    #allocation8 [shape = 'u8[4096]{0}', space=vmem, size = 0x1000, scoped, tag = 'output window, operand 0, single buffered']
    %10 = vsyncpa [#allocation3], 0
    %11 = vsyncpa [#allocation6], 0
    %12 = vsyncpa [#allocation4], 0
    // Predicated region
    $region2: #{tpu_custom_call.1} parent=1 // pred_check
      _
    $region3: #{tpu_custom_call.1} parent=1 // pred_check_branch
      %14 = sbr.rel (0) target = $region5
    $region4: #{tpu_custom_call.1} parent=1 // pred_region
      _
    $region5: #{tpu_custom_call.1} parent=1 // pred_fallthru
      _
    // Predicated region
    $region6: #{tpu_custom_call.1} parent=1 // pred_check
      _
    $region7: #{tpu_custom_call.1} parent=1 // pred_check_branch
      %16 = sbr.rel (0) target = $region9
    $region8: #{tpu_custom_call.1} parent=1 // pred_region
      %s18 = ssub.s32 256, 256
      %19 = vsyncadd [#allocation3], %s18
      %s20 = sshll.u32 [#allocation2], 4
      %s21 = int_to_ptr.vmem [resolvable:$true] %s20
      %26 = dma.hbm_to_vmem [thread:$0]  %s1, 256, %s21, [#allocation3], 128, 128, 8
    $region9: #{tpu_custom_call.1} parent=1 // pred_fallthru
      _
    // Predicated region
    $region10: #{tpu_custom_call.1} parent=1 // pred_check
      _
    $region11: #{tpu_custom_call.1} parent=1 // pred_check_branch
      %28 = sbr.rel (0) target = $region13
    $region12: #{tpu_custom_call.1} parent=1 // pred_region
      %s30 = ssub.s32 512, 512
      %31 = vsyncadd [#allocation6], %s30
      %s32 = sshll.u32 [#allocation5], 4
      %s33 = int_to_ptr.vmem [resolvable:$true] %s32
      %38 = dma.hbm_to_vmem [thread:$0]  %s2, 512, %s33, [#allocation6], 128, 128, 8
    $region13: #{tpu_custom_call.1} parent=1 // pred_fallthru
      _
    // Predicated region
    $region14: #{tpu_custom_call.1} parent=1 // pred_check
      _
    $region15: #{tpu_custom_call.1} parent=1 // pred_check_branch
      %40 = sbr.rel (0) target = $region17
    $region16: #{tpu_custom_call.1} parent=1 // pred_region
      %s42 = ssub.s32 512, 512
      %43 = vsyncadd [#allocation6], %s42
      %s44 = sshll.u32 [#allocation7], 4
      %s45 = int_to_ptr.vmem [resolvable:$true] %s44
      %50 = dma.hbm_to_vmem [thread:$0]  %s3, 512, %s45, [#allocation6], 128, 128, 8
    $region17: #{tpu_custom_call.1} parent=1 // pred_fallthru
      _
    // Predicated region
    $region18: #{tpu_custom_call.1} parent=1 // pred_check
      _
    $region19: #{tpu_custom_call.1} parent=1 // pred_check_branch
      %52 = sbr.rel (0) target = $region21
    $region20: #{tpu_custom_call.1} parent=1 // pred_region
      _
    $region21: #{tpu_custom_call.1} parent=1 // pred_fallthru
      _
    // Predicated region
    $region22: #{tpu_custom_call.1} parent=1 // pred_check
      _
    $region23: #{tpu_custom_call.1} parent=1 // pred_check_branch
      %54 = sbr.rel (0) target = $region25
    $region24: #{tpu_custom_call.1} parent=1 // pred_region
      %55 = dma.done [#allocation3], 256
    $region25: #{tpu_custom_call.1} parent=1 // pred_fallthru
      _
    // Predicated region
    $region26: #{tpu_custom_call.1} parent=1 // pred_check
      _
    $region27: #{tpu_custom_call.1} parent=1 // pred_check_branch
      %57 = sbr.rel (0) target = $region29
    $region28: #{tpu_custom_call.1} parent=1 // pred_region
      %58 = dma.done [#allocation6], 512
    $region29: #{tpu_custom_call.1} parent=1 // pred_fallthru
      _
    // Predicated region
    $region30: #{tpu_custom_call.1} parent=1 // pred_check
      _
    $region31: #{tpu_custom_call.1} parent=1 // pred_check_branch
      %60 = sbr.rel (0) target = $region33
    $region32: #{tpu_custom_call.1} parent=1 // pred_region
      %61 = dma.done [#allocation6], 512
    $region33: #{tpu_custom_call.1} parent=1 // pred_fallthru
      _
    %v62 = vld [vmem:[%s0] sm:$0xff]
    %v63 = vlaneseq
    %v64 = vand.u32 %v63, 127
    %65 = vset.pattern.permute.xlu0 0
    %66 = vperm.xlu0 %65, %v62
    %v67 = vpop.permute.xlu0 %66
    %vm68 = vcmp.eq.s32.totalorder %v64, %v67
    %v69 = vsel %vm68, 1, 0
    %v70 = vcvt.s32.f32 %v69
    %v71 = vld [vmem:[#allocation2] sm:$0xff]
    %v72 = vld [vmem:[#allocation2 + $0x8] sm:$0xff]
    %v73 = vld [vmem:[#allocation5] sm:$0xff]
    %v74 = vld [vmem:[#allocation5 + $0x8] sm:$0xff]
    %v75 = vld [vmem:[#allocation5 + $0x10] sm:$0xff]
    %v76 = vld [vmem:[#allocation5 + $0x18] sm:$0xff]
    %vm77 = vcmask 261120
    %v79 = vsel %vm77, %v71, 0
    %v82 = vsel %vm77, %v72, 0
    %84 = vmatprep.subr.mxu0 0.0
    %85 = vmatpush1.msra.mxu0 0.0
    %86 = vmatprep.subr.mxu0 0.0
    %87 = vmatpush1.msra.mxu0 0.0
    %88 = vmatprep.subr.mxu0 0.0
    %89 = vmatpush1.msra.mxu0 0.0
    %90 = vmatprep.subr.mxu0 0.0
    %91 = vmatpush1.msra.mxu0 0.0
    %92 = vmatprep.subr.mxu0 0.0
    %93 = vmatpush1.msra.mxu0 0.0
    %94 = vmatprep.subr.mxu0 0.0
    %95 = vmatpush1.msra.mxu0 0.0
    %96 = vmatprep.subr.mxu0 0.0
    %97 = vmatpush1.msra.mxu0 0.0
    %98 = vmatprep.subr.mxu0 0.0
    %99 = vmatpush1.msra.mxu0 0.0
    %100 = vmatprep.subr.mxu0 0.0
    %101 = vmatpush1.msra.mxu0 0.0
    %102 = vmatprep.subr.mxu0 0.0
    %103 = vmatpush1.msra.mxu0 0.0
    %104 = vmatprep.subr.mxu0 0.0
    %105 = vmatpush1.msra.mxu0 0.0
    %106 = vmatprep.subr.mxu0 0.0
    %107 = vmatpush1.msra.mxu0 0.0
    %108 = vmatprep.subr.mxu0 0.0
    %109 = vmatpush1.msra.mxu0 %v76
    %110 = vmatprep.subr.mxu0 0.0
    %111 = vmatpush1.msra.mxu0 %v75
    %112 = vmatprep.subr.mxu0 0.0
    %113 = vmatpush1.msra.mxu0 %v74
    %114 = vmatprep.subr.mxu0 0.0
    %115 = vmatpush1.msra.mxu0 %v73
    %116 = vmatprep.subr.mxu0 0.0
    %117 = vmatpush2.msra.mxu0 0.0
    %118 = vmatprep.subr.mxu0 0.0
    %119 = vmatpush2.msra.mxu0 0.0
    %120 = vmatprep.subr.mxu0 0.0
    %121 = vmatpush2.msra.mxu0 0.0
    %122 = vmatprep.subr.mxu0 0.0
    %123 = vmatpush2.msra.mxu0 0.0
    %124 = vmatprep.subr.mxu0 0.0
    %125 = vmatpush2.msra.mxu0 0.0
    %126 = vmatprep.subr.mxu0 0.0
    %127 = vmatpush2.msra.mxu0 0.0
    %128 = vmatprep.subr.mxu0 0.0
    %129 = vmatpush2.msra.mxu0 0.0
    %130 = vmatprep.subr.mxu0 0.0
    %131 = vmatpush2.msra.mxu0 0.0
    %132 = vmatprep.subr.mxu0 0.0
    %133 = vmatpush2.msra.mxu0 0.0
    %134 = vmatprep.subr.mxu0 0.0
    %135 = vmatpush2.msra.mxu0 0.0
    %136 = vmatprep.subr.mxu0 0.0
    %137 = vmatpush2.msra.mxu0 0.0
    %138 = vmatprep.subr.mxu0 0.0
    %139 = vmatpush2.msra.mxu0 0.0
    %140 = vmatprep.subr.mxu0 0.0
    %141 = vmatpush2.msra.mxu0 0.0
    %142 = vmatprep.subr.mxu0 0.0
    %143 = vmatpush2.msra.mxu0 0.0
    %144 = vmatprep.subr.mxu0 0.0
    %145 = vmatpush2.msra.mxu0 0.0
    %146 = vmatprep.subr.mxu0 0.0
    %147 = vmatpush2.msra.mxu0 0.0
    %148 = vmatprep.mubr.f32.mxu0 0.0
    %149 = vmatmul.mubr.f32.gmra.mxu0 %v79
    %v150 = vpop.f32.mrf.mxu0
    %v151 = vadd.f32 0.0, %v150
    %v152 = vpop.f32.mrf.mxu0
    %153 = vmatprep.mubr.f32.mxu0 0.0
    %154 = vmatmul.mubr.f32.gmra.mxu0 %v82
    %v155 = vpop.f32.mrf.mxu0
    %v156 = vadd.f32 0.0, %v155
    %v157 = vpop.f32.mrf.mxu0
    %158 = vdwg.mxu0
    %v159 = vld [vmem:[%s4] sm:$0x1]
    %v161 = vlaneseq
    %v162 = vshrl.u32 %v161, 7
    %v163 = vsub.s32 0, %v162
    %v164 = vrot.slane %v159, %v163
    %vm166 = vcmask 130048
    %v168 = vsel %vm166, %v70, 0
    %170 = vmatprep.subr.mxu0 0.0
    %171 = vmatpush1.msra.mxu0 0.0
    %172 = vmatprep.subr.mxu0 0.0
    %173 = vmatpush1.msra.mxu0 0.0
    %174 = vmatprep.subr.mxu0 0.0
    %175 = vmatpush1.msra.mxu0 0.0
    %176 = vmatprep.subr.mxu0 0.0
    %177 = vmatpush1.msra.mxu0 0.0
    %178 = vmatprep.subr.mxu0 0.0
    %179 = vmatpush1.msra.mxu0 0.0
    %180 = vmatprep.subr.mxu0 0.0
    %181 = vmatpush1.msra.mxu0 0.0
    %182 = vmatprep.subr.mxu0 0.0
    %183 = vmatpush1.msra.mxu0 0.0
    %184 = vmatprep.subr.mxu0 0.0
    %185 = vmatpush1.msra.mxu0 0.0
    %186 = vmatprep.subr.mxu0 0.0
    %187 = vmatpush1.msra.mxu0 0.0
    %188 = vmatprep.subr.mxu0 0.0
    %189 = vmatpush1.msra.mxu0 0.0
    %190 = vmatprep.subr.mxu0 0.0
    %191 = vmatpush1.msra.mxu0 0.0
    %192 = vmatprep.subr.mxu0 0.0
    %193 = vmatpush1.msra.mxu0 0.0
    %194 = vmatprep.subr.mxu0 0.0
    %195 = vmatpush1.msra.mxu0 0.0
    %196 = vmatprep.subr.mxu0 0.0
    %197 = vmatpush1.msra.mxu0 0.0
    %198 = vmatprep.subr.mxu0 0.0
    %199 = vmatpush1.msra.mxu0 %v156
    %200 = vmatprep.subr.mxu0 0.0
    %201 = vmatpush1.msra.mxu0 %v151
    %202 = vmatprep.subr.mxu0 0.0
    %203 = vmatpush2.msra.mxu0 0.0
    %204 = vmatprep.subr.mxu0 0.0
    %205 = vmatpush2.msra.mxu0 0.0
    %206 = vmatprep.subr.mxu0 0.0
    %207 = vmatpush2.msra.mxu0 0.0
    %208 = vmatprep.subr.mxu0 0.0
    %209 = vmatpush2.msra.mxu0 0.0
    %210 = vmatprep.subr.mxu0 0.0
    %211 = vmatpush2.msra.mxu0 0.0
    %212 = vmatprep.subr.mxu0 0.0
    %213 = vmatpush2.msra.mxu0 0.0
    %214 = vmatprep.subr.mxu0 0.0
    %215 = vmatpush2.msra.mxu0 0.0
    %216 = vmatprep.subr.mxu0 0.0
    %217 = vmatpush2.msra.mxu0 0.0
    %218 = vmatprep.subr.mxu0 0.0
    %219 = vmatpush2.msra.mxu0 0.0
    %220 = vmatprep.subr.mxu0 0.0
    %221 = vmatpush2.msra.mxu0 0.0
    %222 = vmatprep.subr.mxu0 0.0
    %223 = vmatpush2.msra.mxu0 0.0
    %224 = vmatprep.subr.mxu0 0.0
    %225 = vmatpush2.msra.mxu0 0.0
    %226 = vmatprep.subr.mxu0 0.0
    %227 = vmatpush2.msra.mxu0 0.0
    %228 = vmatprep.subr.mxu0 0.0
    %229 = vmatpush2.msra.mxu0 0.0
    %230 = vmatprep.subr.mxu0 0.0
    %231 = vmatpush2.msra.mxu0 0.0
    %232 = vmatprep.subr.mxu0 0.0
    %233 = vmatpush2.msra.mxu0 0.0
    %234 = vmatprep.mubr.f32.mxu0 0.0
    %235 = vmatmul.mubr.f32.gmra.mxu0 %v168
    %v236 = vpop.f32.mrf.mxu0
    %v237 = vadd.f32 %v164, %v236
    %v238 = vpop.f32.mrf.mxu0
    %239 = vdwg.mxu0
    %v240 = vld [vmem:[#allocation7] sm:$0xff]
    %v241 = vld [vmem:[#allocation7 + $0x8] sm:$0xff]
    %v242 = vld [vmem:[#allocation7 + $0x10] sm:$0xff]
    %v243 = vld [vmem:[#allocation7 + $0x18] sm:$0xff]
    %v245 = vsel %vm77, 0.0, 0
    %247 = vmatprep.subr.mxu0 0.0
    %248 = vmatpush1.msra.mxu0 0.0
    %249 = vmatprep.subr.mxu0 0.0
    %250 = vmatpush1.msra.mxu0 0.0
    %251 = vmatprep.subr.mxu0 0.0
    %252 = vmatpush1.msra.mxu0 0.0
    %253 = vmatprep.subr.mxu0 0.0
    %254 = vmatpush1.msra.mxu0 0.0
    %255 = vmatprep.subr.mxu0 0.0
    %256 = vmatpush1.msra.mxu0 0.0
    %257 = vmatprep.subr.mxu0 0.0
    %258 = vmatpush1.msra.mxu0 0.0
    %259 = vmatprep.subr.mxu0 0.0
    %260 = vmatpush1.msra.mxu0 0.0
    %261 = vmatprep.subr.mxu0 0.0
    %262 = vmatpush1.msra.mxu0 0.0
    %263 = vmatprep.subr.mxu0 0.0
    %264 = vmatpush1.msra.mxu0 0.0
    %265 = vmatprep.subr.mxu0 0.0
    %266 = vmatpush1.msra.mxu0 0.0
    %267 = vmatprep.subr.mxu0 0.0
    %268 = vmatpush1.msra.mxu0 0.0
    %269 = vmatprep.subr.mxu0 0.0
    %270 = vmatpush1.msra.mxu0 0.0
    %271 = vmatprep.subr.mxu0 0.0
    %272 = vmatpush1.msra.mxu0 %v243
    %273 = vmatprep.subr.mxu0 0.0
    %274 = vmatpush1.msra.mxu0 %v242
    %275 = vmatprep.subr.mxu0 0.0
    %276 = vmatpush1.msra.mxu0 %v241
    %277 = vmatprep.subr.mxu0 0.0
    %278 = vmatpush1.msra.mxu0 %v240
    %279 = vmatprep.subr.mxu0 0.0
    %280 = vmatpush2.msra.mxu0 0.0
    %281 = vmatprep.subr.mxu0 0.0
    %282 = vmatpush2.msra.mxu0 0.0
    %283 = vmatprep.subr.mxu0 0.0
    %284 = vmatpush2.msra.mxu0 0.0
    %285 = vmatprep.subr.mxu0 0.0
    %286 = vmatpush2.msra.mxu0 0.0
    %287 = vmatprep.subr.mxu0 0.0
    %288 = vmatpush2.msra.mxu0 0.0
    %289 = vmatprep.subr.mxu0 0.0
    %290 = vmatpush2.msra.mxu0 0.0
    %291 = vmatprep.subr.mxu0 0.0
    %292 = vmatpush2.msra.mxu0 0.0
    %293 = vmatprep.subr.mxu0 0.0
    %294 = vmatpush2.msra.mxu0 0.0
    %295 = vmatprep.subr.mxu0 0.0
    %296 = vmatpush2.msra.mxu0 0.0
    %297 = vmatprep.subr.mxu0 0.0
    %298 = vmatpush2.msra.mxu0 0.0
    %299 = vmatprep.subr.mxu0 0.0
    %300 = vmatpush2.msra.mxu0 0.0
    %301 = vmatprep.subr.mxu0 0.0
    %302 = vmatpush2.msra.mxu0 0.0
    %303 = vmatprep.subr.mxu0 0.0
    %304 = vmatpush2.msra.mxu0 0.0
    %305 = vmatprep.subr.mxu0 0.0
    %306 = vmatpush2.msra.mxu0 0.0
    %307 = vmatprep.subr.mxu0 0.0
    %308 = vmatpush2.msra.mxu0 0.0
    %309 = vmatprep.subr.mxu0 0.0
    %310 = vmatpush2.msra.mxu0 0.0
    %311 = vmatprep.mubr.f32.mxu0 0.0
    %312 = vmatmul.mubr.f32.gmra.mxu0 %v245
    %v313 = vpop.f32.mrf.mxu0
    %v314 = vadd.f32 0.0, %v313
    %v315 = vpop.f32.mrf.mxu0
    %316 = vdwg.mxu0
    %v317 = vadd.f32 %v237, %v314
    %v318 = vxor.u32 %v317, 2147483648
    %v319 = vmul.f32 %v318, 1.442695
    %v320 = vpow.pop %v319
    %v321 = vadd.f32 %v320, 1.0
    %v322 = vrcp.pop %v321
    %v323 = vmul.f32 1.0, %v322
    %v324 = vtanh.pop %v317
    %v325 = vmul.f32 %v323, 0.0
    %327 = vrot.lane.b32.xlu0 %v324, 64
    %v328 = vpop.permute.xlu0 %327
    %v330 = vmul.f32 %v323, %v328
    %332 = vrot.lane.b32.xlu0 %v330, 32
    %v333 = vpop.permute.xlu0 %332
    %v335 = vadd.f32 %v325, %v333
    %v336 = vtanh.pop %v335
    %338 = vrot.lane.b32.xlu0 %v336, 64
    %v339 = vpop.permute.xlu0 %338
    %v341 = vmul.f32 %v323, %v339
    %343 = vrot.lane.b32.xlu0 %v341, 32
    %v344 = vpop.permute.xlu0 %343
    %vm346 = vcmask 253952
    %347 = vst.msk [vmem:[#allocation8] sm:$0x1] %vm346, %v344
    %v348 = vld [vmem:[#allocation7] sm:$0xff]
    %v349 = vld [vmem:[#allocation7 + $0x8] sm:$0xff]
    %v350 = vld [vmem:[#allocation7 + $0x10] sm:$0xff]
    %v351 = vld [vmem:[#allocation7 + $0x18] sm:$0xff]
    %v352 = vsel %vm77, %v344, 0
    %354 = vmatprep.subr.mxu0 0.0
    %355 = vmatpush1.msra.mxu0 0.0
    %356 = vmatprep.subr.mxu0 0.0
    %357 = vmatpush1.msra.mxu0 0.0
    %358 = vmatprep.subr.mxu0 0.0
    %359 = vmatpush1.msra.mxu0 0.0
    %360 = vmatprep.subr.mxu0 0.0
    %361 = vmatpush1.msra.mxu0 0.0
    %362 = vmatprep.subr.mxu0 0.0
    %363 = vmatpush1.msra.mxu0 0.0
    %364 = vmatprep.subr.mxu0 0.0
    %365 = vmatpush1.msra.mxu0 0.0
    %366 = vmatprep.subr.mxu0 0.0
    %367 = vmatpush1.msra.mxu0 0.0
    %368 = vmatprep.subr.mxu0 0.0
    %369 = vmatpush1.msra.mxu0 0.0
    %370 = vmatprep.subr.mxu0 0.0
    %371 = vmatpush1.msra.mxu0 0.0
    %372 = vmatprep.subr.mxu0 0.0
    %373 = vmatpush1.msra.mxu0 0.0
    %374 = vmatprep.subr.mxu0 0.0
    %375 = vmatpush1.msra.mxu0 0.0
    %376 = vmatprep.subr.mxu0 0.0
    %377 = vmatpush1.msra.mxu0 0.0
    %378 = vmatprep.subr.mxu0 0.0
    %379 = vmatpush1.msra.mxu0 %v351
    %380 = vmatprep.subr.mxu0 0.0
    %381 = vmatpush1.msra.mxu0 %v350
    %382 = vmatprep.subr.mxu0 0.0
    %383 = vmatpush1.msra.mxu0 %v349
    %384 = vmatprep.subr.mxu0 0.0
    %385 = vmatpush1.msra.mxu0 %v348
    %386 = vmatprep.subr.mxu0 0.0
    %387 = vmatpush2.msra.mxu0 0.0
    %388 = vmatprep.subr.mxu0 0.0
    %389 = vmatpush2.msra.mxu0 0.0
    %390 = vmatprep.subr.mxu0 0.0
    %391 = vmatpush2.msra.mxu0 0.0
    %392 = vmatprep.subr.mxu0 0.0
    %393 = vmatpush2.msra.mxu0 0.0
    %394 = vmatprep.subr.mxu0 0.0
    %395 = vmatpush2.msra.mxu0 0.0
    %396 = vmatprep.subr.mxu0 0.0
    %397 = vmatpush2.msra.mxu0 0.0
    %398 = vmatprep.subr.mxu0 0.0
    %399 = vmatpush2.msra.mxu0 0.0
    %400 = vmatprep.subr.mxu0 0.0
    %401 = vmatpush2.msra.mxu0 0.0
    %402 = vmatprep.subr.mxu0 0.0
    %403 = vmatpush2.msra.mxu0 0.0
    %404 = vmatprep.subr.mxu0 0.0
    %405 = vmatpush2.msra.mxu0 0.0
    %406 = vmatprep.subr.mxu0 0.0
    %407 = vmatpush2.msra.mxu0 0.0
    %408 = vmatprep.subr.mxu0 0.0
    %409 = vmatpush2.msra.mxu0 0.0
    %410 = vmatprep.subr.mxu0 0.0
    %411 = vmatpush2.msra.mxu0 0.0
    %412 = vmatprep.subr.mxu0 0.0
    %413 = vmatpush2.msra.mxu0 0.0
    %414 = vmatprep.subr.mxu0 0.0
    %415 = vmatpush2.msra.mxu0 0.0
    %416 = vmatprep.subr.mxu0 0.0
    %417 = vmatpush2.msra.mxu0 0.0
    %418 = vmatprep.mubr.f32.mxu0 0.0
    %419 = vmatmul.mubr.f32.gmra.mxu0 %v352
    %v420 = vpop.f32.mrf.mxu0
    %v421 = vadd.f32 0.0, %v420
    %v422 = vpop.f32.mrf.mxu0
    %423 = vdwg.mxu0
    %v425 = vrot.slane %v421, 7
    %v427 = vadd.f32 %v237, %v425
    %v428 = vxor.u32 %v427, 2147483648
    %v429 = vmul.f32 %v428, 1.442695
    %v430 = vpow.pop %v429
    %v431 = vadd.f32 %v430, 1.0
    %v432 = vrcp.pop %v431
    %v433 = vmul.f32 1.0, %v432
    %v434 = vtanh.pop %v427
    %v436 = vrot.slane %v335, 7
    %v438 = vmul.f32 %v433, %v436
    %440 = vrot.lane.b32.xlu0 %v434, 64
    %v441 = vpop.permute.xlu0 %440
    %v443 = vmul.f32 %v433, %v441
    %445 = vrot.lane.b32.xlu0 %v443, 32
    %v446 = vpop.permute.xlu0 %445
    %v448 = vadd.f32 %v438, %v446
    %v449 = vtanh.pop %v448
    %451 = vrot.lane.b32.xlu0 %v449, 64
    %v452 = vpop.permute.xlu0 %451
    %v454 = vmul.f32 %v433, %v452
    %456 = vrot.lane.b32.xlu0 %v454, 32
    %v457 = vpop.permute.xlu0 %456
    %vm459 = vcmask 254977
    %460 = vst.msk [vmem:[#allocation8] sm:$0x2] %vm459, %v457
    %v461 = vld [vmem:[#allocation7] sm:$0xff]
    %v462 = vld [vmem:[#allocation7 + $0x8] sm:$0xff]
    %v463 = vld [vmem:[#allocation7 + $0x10] sm:$0xff]
    %v464 = vld [vmem:[#allocation7 + $0x18] sm:$0xff]
    %v465 = vrot.slane %v454, 1
    %466 = vrot.lane.b32.xlu0 %v465, 32
    %v467 = vpop.permute.xlu0 %466
    %v468 = vsel %vm77, %v467, 0
    %470 = vmatprep.subr.mxu0 0.0
    %471 = vmatpush1.msra.mxu0 0.0
    %472 = vmatprep.subr.mxu0 0.0
    %473 = vmatpush1.msra.mxu0 0.0
    %474 = vmatprep.subr.mxu0 0.0
    %475 = vmatpush1.msra.mxu0 0.0
    %476 = vmatprep.subr.mxu0 0.0
    %477 = vmatpush1.msra.mxu0 0.0
    %478 = vmatprep.subr.mxu0 0.0
    %479 = vmatpush1.msra.mxu0 0.0
    %480 = vmatprep.subr.mxu0 0.0
    %481 = vmatpush1.msra.mxu0 0.0
    %482 = vmatprep.subr.mxu0 0.0
    %483 = vmatpush1.msra.mxu0 0.0
    %484 = vmatprep.subr.mxu0 0.0
    %485 = vmatpush1.msra.mxu0 0.0
    %486 = vmatprep.subr.mxu0 0.0
    %487 = vmatpush1.msra.mxu0 0.0
    %488 = vmatprep.subr.mxu0 0.0
    %489 = vmatpush1.msra.mxu0 0.0
    %490 = vmatprep.subr.mxu0 0.0
    %491 = vmatpush1.msra.mxu0 0.0
    %492 = vmatprep.subr.mxu0 0.0
    %493 = vmatpush1.msra.mxu0 0.0
    %494 = vmatprep.subr.mxu0 0.0
    %495 = vmatpush1.msra.mxu0 %v464
    %496 = vmatprep.subr.mxu0 0.0
    %497 = vmatpush1.msra.mxu0 %v463
    %498 = vmatprep.subr.mxu0 0.0
    %499 = vmatpush1.msra.mxu0 %v462
    %500 = vmatprep.subr.mxu0 0.0
    %501 = vmatpush1.msra.mxu0 %v461
    %502 = vmatprep.subr.mxu0 0.0
    %503 = vmatpush2.msra.mxu0 0.0
    %504 = vmatprep.subr.mxu0 0.0
    %505 = vmatpush2.msra.mxu0 0.0
    %506 = vmatprep.subr.mxu0 0.0
    %507 = vmatpush2.msra.mxu0 0.0
    %508 = vmatprep.subr.mxu0 0.0
    %509 = vmatpush2.msra.mxu0 0.0
    %510 = vmatprep.subr.mxu0 0.0
    %511 = vmatpush2.msra.mxu0 0.0
    %512 = vmatprep.subr.mxu0 0.0
    %513 = vmatpush2.msra.mxu0 0.0
    %514 = vmatprep.subr.mxu0 0.0
    %515 = vmatpush2.msra.mxu0 0.0
    %516 = vmatprep.subr.mxu0 0.0
    %517 = vmatpush2.msra.mxu0 0.0
    %518 = vmatprep.subr.mxu0 0.0
    %519 = vmatpush2.msra.mxu0 0.0
    %520 = vmatprep.subr.mxu0 0.0
    %521 = vmatpush2.msra.mxu0 0.0
    %522 = vmatprep.subr.mxu0 0.0
    %523 = vmatpush2.msra.mxu0 0.0
    %524 = vmatprep.subr.mxu0 0.0
    %525 = vmatpush2.msra.mxu0 0.0
    %526 = vmatprep.subr.mxu0 0.0
    %527 = vmatpush2.msra.mxu0 0.0
    %528 = vmatprep.subr.mxu0 0.0
    %529 = vmatpush2.msra.mxu0 0.0
    %530 = vmatprep.subr.mxu0 0.0
    %531 = vmatpush2.msra.mxu0 0.0
    %532 = vmatprep.subr.mxu0 0.0
    %533 = vmatpush2.msra.mxu0 0.0
    %534 = vmatprep.mubr.f32.mxu0 0.0
    %535 = vmatmul.mubr.f32.gmra.mxu0 %v468
    %v536 = vpop.f32.mrf.mxu0
    %v537 = vadd.f32 0.0, %v536
    %v538 = vpop.f32.mrf.mxu0
    %539 = vdwg.mxu0
    %v541 = vrot.slane %v537, 6
    %v543 = vadd.f32 %v237, %v541
    %v544 = vxor.u32 %v543, 2147483648
    %v545 = vmul.f32 %v544, 1.442695
    %v546 = vpow.pop %v545
    %v547 = vadd.f32 %v546, 1.0
    %v548 = vrcp.pop %v547
    %v549 = vmul.f32 1.0, %v548
    %v550 = vtanh.pop %v543
    %v552 = vrot.slane %v448, 7
    %v554 = vmul.f32 %v549, %v552
    %556 = vrot.lane.b32.xlu0 %v550, 64
    %v557 = vpop.permute.xlu0 %556
    %v559 = vmul.f32 %v549, %v557
    %561 = vrot.lane.b32.xlu0 %v559, 32
    %v562 = vpop.permute.xlu0 %561
    %v564 = vadd.f32 %v554, %v562
    %v565 = vtanh.pop %v564
    %567 = vrot.lane.b32.xlu0 %v565, 64
    %v568 = vpop.permute.xlu0 %567
    %v570 = vmul.f32 %v549, %v568
    %572 = vrot.lane.b32.xlu0 %v570, 32
    %v573 = vpop.permute.xlu0 %572
    %vm575 = vcmask 256002
    %576 = vst.msk [vmem:[#allocation8] sm:$0x4] %vm575, %v573
    %v577 = vld [vmem:[#allocation7] sm:$0xff]
    %v578 = vld [vmem:[#allocation7 + $0x8] sm:$0xff]
    %v579 = vld [vmem:[#allocation7 + $0x10] sm:$0xff]
    %v580 = vld [vmem:[#allocation7 + $0x18] sm:$0xff]
    %v581 = vrot.slane %v570, 2
    %582 = vrot.lane.b32.xlu0 %v581, 32
    %v583 = vpop.permute.xlu0 %582
    %v584 = vsel %vm77, %v583, 0
    %586 = vmatprep.subr.mxu0 0.0
    %587 = vmatpush1.msra.mxu0 0.0
    %588 = vmatprep.subr.mxu0 0.0
    %589 = vmatpush1.msra.mxu0 0.0
    %590 = vmatprep.subr.mxu0 0.0
    %591 = vmatpush1.msra.mxu0 0.0
    %592 = vmatprep.subr.mxu0 0.0
    %593 = vmatpush1.msra.mxu0 0.0
    %594 = vmatprep.subr.mxu0 0.0
    %595 = vmatpush1.msra.mxu0 0.0
    %596 = vmatprep.subr.mxu0 0.0
    %597 = vmatpush1.msra.mxu0 0.0
    %598 = vmatprep.subr.mxu0 0.0
    %599 = vmatpush1.msra.mxu0 0.0
    %600 = vmatprep.subr.mxu0 0.0
    %601 = vmatpush1.msra.mxu0 0.0
    %602 = vmatprep.subr.mxu0 0.0
    %603 = vmatpush1.msra.mxu0 0.0
    %604 = vmatprep.subr.mxu0 0.0
    %605 = vmatpush1.msra.mxu0 0.0
    %606 = vmatprep.subr.mxu0 0.0
    %607 = vmatpush1.msra.mxu0 0.0
    %608 = vmatprep.subr.mxu0 0.0
    %609 = vmatpush1.msra.mxu0 0.0
    %610 = vmatprep.subr.mxu0 0.0
    %611 = vmatpush1.msra.mxu0 %v580
    %612 = vmatprep.subr.mxu0 0.0
    %613 = vmatpush1.msra.mxu0 %v579
    %614 = vmatprep.subr.mxu0 0.0
    %615 = vmatpush1.msra.mxu0 %v578
    %616 = vmatprep.subr.mxu0 0.0
    %617 = vmatpush1.msra.mxu0 %v577
    %618 = vmatprep.subr.mxu0 0.0
    %619 = vmatpush2.msra.mxu0 0.0
    %620 = vmatprep.subr.mxu0 0.0
    %621 = vmatpush2.msra.mxu0 0.0
    %622 = vmatprep.subr.mxu0 0.0
    %623 = vmatpush2.msra.mxu0 0.0
    %624 = vmatprep.subr.mxu0 0.0
    %625 = vmatpush2.msra.mxu0 0.0
    %626 = vmatprep.subr.mxu0 0.0
    %627 = vmatpush2.msra.mxu0 0.0
    %628 = vmatprep.subr.mxu0 0.0
    %629 = vmatpush2.msra.mxu0 0.0
    %630 = vmatprep.subr.mxu0 0.0
    %631 = vmatpush2.msra.mxu0 0.0
    %632 = vmatprep.subr.mxu0 0.0
    %633 = vmatpush2.msra.mxu0 0.0
    %634 = vmatprep.subr.mxu0 0.0
    %635 = vmatpush2.msra.mxu0 0.0
    %636 = vmatprep.subr.mxu0 0.0
    %637 = vmatpush2.msra.mxu0 0.0
    %638 = vmatprep.subr.mxu0 0.0
    %639 = vmatpush2.msra.mxu0 0.0
    %640 = vmatprep.subr.mxu0 0.0
    %641 = vmatpush2.msra.mxu0 0.0
    %642 = vmatprep.subr.mxu0 0.0
    %643 = vmatpush2.msra.mxu0 0.0
    %644 = vmatprep.subr.mxu0 0.0
    %645 = vmatpush2.msra.mxu0 0.0
    %646 = vmatprep.subr.mxu0 0.0
    %647 = vmatpush2.msra.mxu0 0.0
    %648 = vmatprep.subr.mxu0 0.0
    %649 = vmatpush2.msra.mxu0 0.0
    %650 = vmatprep.mubr.f32.mxu0 0.0
    %651 = vmatmul.mubr.f32.gmra.mxu0 %v584
    %v652 = vpop.f32.mrf.mxu0
    %v653 = vadd.f32 0.0, %v652
    %v654 = vpop.f32.mrf.mxu0
    %655 = vdwg.mxu0
    %v657 = vrot.slane %v653, 5
    %v659 = vadd.f32 %v237, %v657
    %v660 = vxor.u32 %v659, 2147483648
    %v661 = vmul.f32 %v660, 1.442695
    %v662 = vpow.pop %v661
    %v663 = vadd.f32 %v662, 1.0
    %v664 = vrcp.pop %v663
    %v665 = vmul.f32 1.0, %v664
    %v666 = vtanh.pop %v659
    %v668 = vrot.slane %v564, 7
    %v670 = vmul.f32 %v665, %v668
    %672 = vrot.lane.b32.xlu0 %v666, 64
    %v673 = vpop.permute.xlu0 %672
    %v675 = vmul.f32 %v665, %v673
    %677 = vrot.lane.b32.xlu0 %v675, 32
    %v678 = vpop.permute.xlu0 %677
    %v680 = vadd.f32 %v670, %v678
    %v681 = vtanh.pop %v680
    %683 = vrot.lane.b32.xlu0 %v681, 64
    %v684 = vpop.permute.xlu0 %683
    %v686 = vmul.f32 %v665, %v684
    %688 = vrot.lane.b32.xlu0 %v686, 32
    %v689 = vpop.permute.xlu0 %688
    %vm691 = vcmask 257027
    %692 = vst.msk [vmem:[#allocation8] sm:$0x8] %vm691, %v689
    %v693 = vld [vmem:[#allocation7] sm:$0xff]
    %v694 = vld [vmem:[#allocation7 + $0x8] sm:$0xff]
    %v695 = vld [vmem:[#allocation7 + $0x10] sm:$0xff]
    %v696 = vld [vmem:[#allocation7 + $0x18] sm:$0xff]
    %v697 = vrot.slane %v686, 3
    %698 = vrot.lane.b32.xlu0 %v697, 32
    %v699 = vpop.permute.xlu0 %698
    %v700 = vsel %vm77, %v699, 0
    %702 = vmatprep.subr.mxu0 0.0
    %703 = vmatpush1.msra.mxu0 0.0
    %704 = vmatprep.subr.mxu0 0.0
    %705 = vmatpush1.msra.mxu0 0.0
    %706 = vmatprep.subr.mxu0 0.0
    %707 = vmatpush1.msra.mxu0 0.0
    %708 = vmatprep.subr.mxu0 0.0
    %709 = vmatpush1.msra.mxu0 0.0
    %710 = vmatprep.subr.mxu0 0.0
    %711 = vmatpush1.msra.mxu0 0.0
    %712 = vmatprep.subr.mxu0 0.0
    %713 = vmatpush1.msra.mxu0 0.0
    %714 = vmatprep.subr.mxu0 0.0
    %715 = vmatpush1.msra.mxu0 0.0
    %716 = vmatprep.subr.mxu0 0.0
    %717 = vmatpush1.msra.mxu0 0.0
    %718 = vmatprep.subr.mxu0 0.0
    %719 = vmatpush1.msra.mxu0 0.0
    %720 = vmatprep.subr.mxu0 0.0
    %721 = vmatpush1.msra.mxu0 0.0
    %722 = vmatprep.subr.mxu0 0.0
    %723 = vmatpush1.msra.mxu0 0.0
    %724 = vmatprep.subr.mxu0 0.0
    %725 = vmatpush1.msra.mxu0 0.0
    %726 = vmatprep.subr.mxu0 0.0
    %727 = vmatpush1.msra.mxu0 %v696
    %728 = vmatprep.subr.mxu0 0.0
    %729 = vmatpush1.msra.mxu0 %v695
    %730 = vmatprep.subr.mxu0 0.0
    %731 = vmatpush1.msra.mxu0 %v694
    %732 = vmatprep.subr.mxu0 0.0
    %733 = vmatpush1.msra.mxu0 %v693
    %734 = vmatprep.subr.mxu0 0.0
    %735 = vmatpush2.msra.mxu0 0.0
    %736 = vmatprep.subr.mxu0 0.0
    %737 = vmatpush2.msra.mxu0 0.0
    %738 = vmatprep.subr.mxu0 0.0
    %739 = vmatpush2.msra.mxu0 0.0
    %740 = vmatprep.subr.mxu0 0.0
    %741 = vmatpush2.msra.mxu0 0.0
    %742 = vmatprep.subr.mxu0 0.0
    %743 = vmatpush2.msra.mxu0 0.0
    %744 = vmatprep.subr.mxu0 0.0
    %745 = vmatpush2.msra.mxu0 0.0
    %746 = vmatprep.subr.mxu0 0.0
    %747 = vmatpush2.msra.mxu0 0.0
    %748 = vmatprep.subr.mxu0 0.0
    %749 = vmatpush2.msra.mxu0 0.0
    %750 = vmatprep.subr.mxu0 0.0
    %751 = vmatpush2.msra.mxu0 0.0
    %752 = vmatprep.subr.mxu0 0.0
    %753 = vmatpush2.msra.mxu0 0.0
    %754 = vmatprep.subr.mxu0 0.0
    %755 = vmatpush2.msra.mxu0 0.0
    %756 = vmatprep.subr.mxu0 0.0
    %757 = vmatpush2.msra.mxu0 0.0
    %758 = vmatprep.subr.mxu0 0.0
    %759 = vmatpush2.msra.mxu0 0.0
    %760 = vmatprep.subr.mxu0 0.0
    %761 = vmatpush2.msra.mxu0 0.0
    %762 = vmatprep.subr.mxu0 0.0
    %763 = vmatpush2.msra.mxu0 0.0
    %764 = vmatprep.subr.mxu0 0.0
    %765 = vmatpush2.msra.mxu0 0.0
    %766 = vmatprep.mubr.f32.mxu0 0.0
    %767 = vmatmul.mubr.f32.gmra.mxu0 %v700
    %v768 = vpop.f32.mrf.mxu0
    %v769 = vadd.f32 0.0, %v768
    %v770 = vpop.f32.mrf.mxu0
    %771 = vdwg.mxu0
    %v773 = vrot.slane %v769, 4
    %v775 = vadd.f32 %v237, %v773
    %v776 = vxor.u32 %v775, 2147483648
    %v777 = vmul.f32 %v776, 1.442695
    %v778 = vpow.pop %v777
    %v779 = vadd.f32 %v778, 1.0
    %v780 = vrcp.pop %v779
    %v781 = vmul.f32 1.0, %v780
    %v782 = vtanh.pop %v775
    %v784 = vrot.slane %v680, 7
    %v786 = vmul.f32 %v781, %v784
    %788 = vrot.lane.b32.xlu0 %v782, 64
    %v789 = vpop.permute.xlu0 %788
    %v791 = vmul.f32 %v781, %v789
    %793 = vrot.lane.b32.xlu0 %v791, 32
    %v794 = vpop.permute.xlu0 %793
    %v796 = vadd.f32 %v786, %v794
    %v797 = vtanh.pop %v796
    %799 = vrot.lane.b32.xlu0 %v797, 64
    %v800 = vpop.permute.xlu0 %799
    %v802 = vmul.f32 %v781, %v800
    %804 = vrot.lane.b32.xlu0 %v802, 32
    %v805 = vpop.permute.xlu0 %804
    %vm807 = vcmask 258052
    %808 = vst.msk [vmem:[#allocation8] sm:$0x10] %vm807, %v805
    %v809 = vld [vmem:[#allocation7] sm:$0xff]
    %v810 = vld [vmem:[#allocation7 + $0x8] sm:$0xff]
    %v811 = vld [vmem:[#allocation7 + $0x10] sm:$0xff]
    %v812 = vld [vmem:[#allocation7 + $0x18] sm:$0xff]
    %v813 = vrot.slane %v802, 4
    %814 = vrot.lane.b32.xlu0 %v813, 32
    %v815 = vpop.permute.xlu0 %814
    %v816 = vsel %vm77, %v815, 0
    %818 = vmatprep.subr.mxu0 0.0
    %819 = vmatpush1.msra.mxu0 0.0
    %820 = vmatprep.subr.mxu0 0.0
    %821 = vmatpush1.msra.mxu0 0.0
    %822 = vmatprep.subr.mxu0 0.0
    %823 = vmatpush1.msra.mxu0 0.0
    %824 = vmatprep.subr.mxu0 0.0
    %825 = vmatpush1.msra.mxu0 0.0
    %826 = vmatprep.subr.mxu0 0.0
    %827 = vmatpush1.msra.mxu0 0.0
    %828 = vmatprep.subr.mxu0 0.0
    %829 = vmatpush1.msra.mxu0 0.0
    %830 = vmatprep.subr.mxu0 0.0
    %831 = vmatpush1.msra.mxu0 0.0
    %832 = vmatprep.subr.mxu0 0.0
    %833 = vmatpush1.msra.mxu0 0.0
    %834 = vmatprep.subr.mxu0 0.0
    %835 = vmatpush1.msra.mxu0 0.0
    %836 = vmatprep.subr.mxu0 0.0
    %837 = vmatpush1.msra.mxu0 0.0
    %838 = vmatprep.subr.mxu0 0.0
    %839 = vmatpush1.msra.mxu0 0.0
    %840 = vmatprep.subr.mxu0 0.0
    %841 = vmatpush1.msra.mxu0 0.0
    %842 = vmatprep.subr.mxu0 0.0
    %843 = vmatpush1.msra.mxu0 %v812
    %844 = vmatprep.subr.mxu0 0.0
    %845 = vmatpush1.msra.mxu0 %v811
    %846 = vmatprep.subr.mxu0 0.0
    %847 = vmatpush1.msra.mxu0 %v810
    %848 = vmatprep.subr.mxu0 0.0
    %849 = vmatpush1.msra.mxu0 %v809
    %850 = vmatprep.subr.mxu0 0.0
    %851 = vmatpush2.msra.mxu0 0.0
    %852 = vmatprep.subr.mxu0 0.0
    %853 = vmatpush2.msra.mxu0 0.0
    %854 = vmatprep.subr.mxu0 0.0
    %855 = vmatpush2.msra.mxu0 0.0
    %856 = vmatprep.subr.mxu0 0.0
    %857 = vmatpush2.msra.mxu0 0.0
    %858 = vmatprep.subr.mxu0 0.0
    %859 = vmatpush2.msra.mxu0 0.0
    %860 = vmatprep.subr.mxu0 0.0
    %861 = vmatpush2.msra.mxu0 0.0
    %862 = vmatprep.subr.mxu0 0.0
    %863 = vmatpush2.msra.mxu0 0.0
    %864 = vmatprep.subr.mxu0 0.0
    %865 = vmatpush2.msra.mxu0 0.0
    %866 = vmatprep.subr.mxu0 0.0
    %867 = vmatpush2.msra.mxu0 0.0
    %868 = vmatprep.subr.mxu0 0.0
    %869 = vmatpush2.msra.mxu0 0.0
    %870 = vmatprep.subr.mxu0 0.0
    %871 = vmatpush2.msra.mxu0 0.0
    %872 = vmatprep.subr.mxu0 0.0
    %873 = vmatpush2.msra.mxu0 0.0
    %874 = vmatprep.subr.mxu0 0.0
    %875 = vmatpush2.msra.mxu0 0.0
    %876 = vmatprep.subr.mxu0 0.0
    %877 = vmatpush2.msra.mxu0 0.0
    %878 = vmatprep.subr.mxu0 0.0
    %879 = vmatpush2.msra.mxu0 0.0
    %880 = vmatprep.subr.mxu0 0.0
    %881 = vmatpush2.msra.mxu0 0.0
    %882 = vmatprep.mubr.f32.mxu0 0.0
    %883 = vmatmul.mubr.f32.gmra.mxu0 %v816
    %v884 = vpop.f32.mrf.mxu0
    %v885 = vadd.f32 0.0, %v884
    %v886 = vpop.f32.mrf.mxu0
    %887 = vdwg.mxu0
    %v889 = vrot.slane %v885, 3
    %v891 = vadd.f32 %v237, %v889
    %v892 = vxor.u32 %v891, 2147483648
    %v893 = vmul.f32 %v892, 1.442695
    %v894 = vpow.pop %v893
    %v895 = vadd.f32 %v894, 1.0
    %v896 = vrcp.pop %v895
    %v897 = vmul.f32 1.0, %v896
    %v898 = vtanh.pop %v891
    %v900 = vrot.slane %v796, 7
    %v902 = vmul.f32 %v897, %v900
    %904 = vrot.lane.b32.xlu0 %v898, 64
    %v905 = vpop.permute.xlu0 %904
    %v907 = vmul.f32 %v897, %v905
    %909 = vrot.lane.b32.xlu0 %v907, 32
    %v910 = vpop.permute.xlu0 %909
    %v912 = vadd.f32 %v902, %v910
    %v913 = vtanh.pop %v912
    %915 = vrot.lane.b32.xlu0 %v913, 64
    %v916 = vpop.permute.xlu0 %915
    %v918 = vmul.f32 %v897, %v916
    %920 = vrot.lane.b32.xlu0 %v918, 32
    %v921 = vpop.permute.xlu0 %920
    %vm923 = vcmask 259077
    %924 = vst.msk [vmem:[#allocation8] sm:$0x20] %vm923, %v921
    %v925 = vld [vmem:[#allocation7] sm:$0xff]
    %v926 = vld [vmem:[#allocation7 + $0x8] sm:$0xff]
    %v927 = vld [vmem:[#allocation7 + $0x10] sm:$0xff]
    %v928 = vld [vmem:[#allocation7 + $0x18] sm:$0xff]
    %v929 = vrot.slane %v918, 5
    %930 = vrot.lane.b32.xlu0 %v929, 32
    %v931 = vpop.permute.xlu0 %930
    %v932 = vsel %vm77, %v931, 0
    %934 = vmatprep.subr.mxu0 0.0
    %935 = vmatpush1.msra.mxu0 0.0
    %936 = vmatprep.subr.mxu0 0.0
    %937 = vmatpush1.msra.mxu0 0.0
    %938 = vmatprep.subr.mxu0 0.0
    %939 = vmatpush1.msra.mxu0 0.0
    %940 = vmatprep.subr.mxu0 0.0
    %941 = vmatpush1.msra.mxu0 0.0
    %942 = vmatprep.subr.mxu0 0.0
    %943 = vmatpush1.msra.mxu0 0.0
    %944 = vmatprep.subr.mxu0 0.0
    %945 = vmatpush1.msra.mxu0 0.0
    %946 = vmatprep.subr.mxu0 0.0
    %947 = vmatpush1.msra.mxu0 0.0
    %948 = vmatprep.subr.mxu0 0.0
    %949 = vmatpush1.msra.mxu0 0.0
    %950 = vmatprep.subr.mxu0 0.0
    %951 = vmatpush1.msra.mxu0 0.0
    %952 = vmatprep.subr.mxu0 0.0
    %953 = vmatpush1.msra.mxu0 0.0
    %954 = vmatprep.subr.mxu0 0.0
    %955 = vmatpush1.msra.mxu0 0.0
    %956 = vmatprep.subr.mxu0 0.0
    %957 = vmatpush1.msra.mxu0 0.0
    %958 = vmatprep.subr.mxu0 0.0
    %959 = vmatpush1.msra.mxu0 %v928
    %960 = vmatprep.subr.mxu0 0.0
    %961 = vmatpush1.msra.mxu0 %v927
    %962 = vmatprep.subr.mxu0 0.0
    %963 = vmatpush1.msra.mxu0 %v926
    %964 = vmatprep.subr.mxu0 0.0
    %965 = vmatpush1.msra.mxu0 %v925
    %966 = vmatprep.subr.mxu0 0.0
    %967 = vmatpush2.msra.mxu0 0.0
    %968 = vmatprep.subr.mxu0 0.0
    %969 = vmatpush2.msra.mxu0 0.0
    %970 = vmatprep.subr.mxu0 0.0
    %971 = vmatpush2.msra.mxu0 0.0
    %972 = vmatprep.subr.mxu0 0.0
    %973 = vmatpush2.msra.mxu0 0.0
    %974 = vmatprep.subr.mxu0 0.0
    %975 = vmatpush2.msra.mxu0 0.0
    %976 = vmatprep.subr.mxu0 0.0
    %977 = vmatpush2.msra.mxu0 0.0
    %978 = vmatprep.subr.mxu0 0.0
    %979 = vmatpush2.msra.mxu0 0.0
    %980 = vmatprep.subr.mxu0 0.0
    %981 = vmatpush2.msra.mxu0 0.0
    %982 = vmatprep.subr.mxu0 0.0
    %983 = vmatpush2.msra.mxu0 0.0
    %984 = vmatprep.subr.mxu0 0.0
    %985 = vmatpush2.msra.mxu0 0.0
    %986 = vmatprep.subr.mxu0 0.0
    %987 = vmatpush2.msra.mxu0 0.0
    %988 = vmatprep.subr.mxu0 0.0
    %989 = vmatpush2.msra.mxu0 0.0
    %990 = vmatprep.subr.mxu0 0.0
    %991 = vmatpush2.msra.mxu0 0.0
    %992 = vmatprep.subr.mxu0 0.0
    %993 = vmatpush2.msra.mxu0 0.0
    %994 = vmatprep.subr.mxu0 0.0
    %995 = vmatpush2.msra.mxu0 0.0
    %996 = vmatprep.subr.mxu0 0.0
    %997 = vmatpush2.msra.mxu0 0.0
    %998 = vmatprep.mubr.f32.mxu0 0.0
    %999 = vmatmul.mubr.f32.gmra.mxu0 %v932
    %v1000 = vpop.f32.mrf.mxu0
    %v1001 = vadd.f32 0.0, %v1000
    %v1002 = vpop.f32.mrf.mxu0
    %1003 = vdwg.mxu0
    %v1005 = vrot.slane %v1001, 2
    %v1007 = vadd.f32 %v237, %v1005
    %v1008 = vxor.u32 %v1007, 2147483648
    %v1009 = vmul.f32 %v1008, 1.442695
    %v1010 = vpow.pop %v1009
    %v1011 = vadd.f32 %v1010, 1.0
    %v1012 = vrcp.pop %v1011
    %v1013 = vmul.f32 1.0, %v1012
    %v1014 = vtanh.pop %v1007
    %v1016 = vrot.slane %v912, 7
    %v1018 = vmul.f32 %v1013, %v1016
    %1020 = vrot.lane.b32.xlu0 %v1014, 64
    %v1021 = vpop.permute.xlu0 %1020
    %v1023 = vmul.f32 %v1013, %v1021
    %1025 = vrot.lane.b32.xlu0 %v1023, 32
    %v1026 = vpop.permute.xlu0 %1025
    %v1028 = vadd.f32 %v1018, %v1026
    %v1029 = vtanh.pop %v1028
    %1031 = vrot.lane.b32.xlu0 %v1029, 64
    %v1032 = vpop.permute.xlu0 %1031
    %v1034 = vmul.f32 %v1013, %v1032
    %1036 = vrot.lane.b32.xlu0 %v1034, 32
    %v1037 = vpop.permute.xlu0 %1036
    %vm1039 = vcmask 260102
    %1040 = vst.msk [vmem:[#allocation8] sm:$0x40] %vm1039, %v1037
    %v1041 = vld [vmem:[#allocation7] sm:$0xff]
    %v1042 = vld [vmem:[#allocation7 + $0x8] sm:$0xff]
    %v1043 = vld [vmem:[#allocation7 + $0x10] sm:$0xff]
    %v1044 = vld [vmem:[#allocation7 + $0x18] sm:$0xff]
    %v1045 = vrot.slane %v1034, 6
    %1046 = vrot.lane.b32.xlu0 %v1045, 32
    %v1047 = vpop.permute.xlu0 %1046
    %v1048 = vsel %vm77, %v1047, 0
    %1050 = vmatprep.subr.mxu0 0.0
    %1051 = vmatpush1.msra.mxu0 0.0
    %1052 = vmatprep.subr.mxu0 0.0
    %1053 = vmatpush1.msra.mxu0 0.0
    %1054 = vmatprep.subr.mxu0 0.0
    %1055 = vmatpush1.msra.mxu0 0.0
    %1056 = vmatprep.subr.mxu0 0.0
    %1057 = vmatpush1.msra.mxu0 0.0
    %1058 = vmatprep.subr.mxu0 0.0
    %1059 = vmatpush1.msra.mxu0 0.0
    %1060 = vmatprep.subr.mxu0 0.0
    %1061 = vmatpush1.msra.mxu0 0.0
    %1062 = vmatprep.subr.mxu0 0.0
    %1063 = vmatpush1.msra.mxu0 0.0
    %1064 = vmatprep.subr.mxu0 0.0
    %1065 = vmatpush1.msra.mxu0 0.0
    %1066 = vmatprep.subr.mxu0 0.0
    %1067 = vmatpush1.msra.mxu0 0.0
    %1068 = vmatprep.subr.mxu0 0.0
    %1069 = vmatpush1.msra.mxu0 0.0
    %1070 = vmatprep.subr.mxu0 0.0
    %1071 = vmatpush1.msra.mxu0 0.0
    %1072 = vmatprep.subr.mxu0 0.0
    %1073 = vmatpush1.msra.mxu0 0.0
    %1074 = vmatprep.subr.mxu0 0.0
    %1075 = vmatpush1.msra.mxu0 %v1044
    %1076 = vmatprep.subr.mxu0 0.0
    %1077 = vmatpush1.msra.mxu0 %v1043
    %1078 = vmatprep.subr.mxu0 0.0
    %1079 = vmatpush1.msra.mxu0 %v1042
    %1080 = vmatprep.subr.mxu0 0.0
    %1081 = vmatpush1.msra.mxu0 %v1041
    %1082 = vmatprep.subr.mxu0 0.0
    %1083 = vmatpush2.msra.mxu0 0.0
    %1084 = vmatprep.subr.mxu0 0.0
    %1085 = vmatpush2.msra.mxu0 0.0
    %1086 = vmatprep.subr.mxu0 0.0
    %1087 = vmatpush2.msra.mxu0 0.0
    %1088 = vmatprep.subr.mxu0 0.0
    %1089 = vmatpush2.msra.mxu0 0.0
    %1090 = vmatprep.subr.mxu0 0.0
    %1091 = vmatpush2.msra.mxu0 0.0
    %1092 = vmatprep.subr.mxu0 0.0
    %1093 = vmatpush2.msra.mxu0 0.0
    %1094 = vmatprep.subr.mxu0 0.0
    %1095 = vmatpush2.msra.mxu0 0.0
    %1096 = vmatprep.subr.mxu0 0.0
    %1097 = vmatpush2.msra.mxu0 0.0
    %1098 = vmatprep.subr.mxu0 0.0
    %1099 = vmatpush2.msra.mxu0 0.0
    %1100 = vmatprep.subr.mxu0 0.0
    %1101 = vmatpush2.msra.mxu0 0.0
    %1102 = vmatprep.subr.mxu0 0.0
    %1103 = vmatpush2.msra.mxu0 0.0
    %1104 = vmatprep.subr.mxu0 0.0
    %1105 = vmatpush2.msra.mxu0 0.0
    %1106 = vmatprep.subr.mxu0 0.0
    %1107 = vmatpush2.msra.mxu0 0.0
    %1108 = vmatprep.subr.mxu0 0.0
    %1109 = vmatpush2.msra.mxu0 0.0
    %1110 = vmatprep.subr.mxu0 0.0
    %1111 = vmatpush2.msra.mxu0 0.0
    %1112 = vmatprep.subr.mxu0 0.0
    %1113 = vmatpush2.msra.mxu0 0.0
    %1114 = vmatprep.mubr.f32.mxu0 0.0
    %1115 = vmatmul.mubr.f32.gmra.mxu0 %v1048
    %v1116 = vpop.f32.mrf.mxu0
    %v1117 = vadd.f32 0.0, %v1116
    %v1118 = vpop.f32.mrf.mxu0
    %1119 = vdwg.mxu0
    %v1121 = vrot.slane %v1117, 1
    %v1123 = vadd.f32 %v237, %v1121
    %v1124 = vxor.u32 %v1123, 2147483648
    %v1125 = vmul.f32 %v1124, 1.442695
    %v1126 = vpow.pop %v1125
    %v1127 = vadd.f32 %v1126, 1.0
    %v1128 = vrcp.pop %v1127
    %v1129 = vmul.f32 1.0, %v1128
    %v1130 = vtanh.pop %v1123
    %v1132 = vrot.slane %v1028, 7
    %v1134 = vmul.f32 %v1129, %v1132
    %1136 = vrot.lane.b32.xlu0 %v1130, 64
    %v1137 = vpop.permute.xlu0 %1136
    %v1139 = vmul.f32 %v1129, %v1137
    %1141 = vrot.lane.b32.xlu0 %v1139, 32
    %v1142 = vpop.permute.xlu0 %1141
    %v1144 = vadd.f32 %v1134, %v1142
    %v1145 = vtanh.pop %v1144
    %1147 = vrot.lane.b32.xlu0 %v1145, 64
    %v1148 = vpop.permute.xlu0 %1147
    %v1150 = vmul.f32 %v1129, %v1148
    %1152 = vrot.lane.b32.xlu0 %v1150, 32
    %v1153 = vpop.permute.xlu0 %1152
    %vm1155 = vcmask 261127
    %1156 = vst.msk [vmem:[#allocation8] sm:$0x80] %vm1155, %v1153
    // Predicated region
    $region34: #{tpu_custom_call.1} parent=1 // pred_check
      _
    $region35: #{tpu_custom_call.1} parent=1 // pred_check_branch
      %1158 = sbr.rel (0) target = $region37
    $region36: #{tpu_custom_call.1} parent=1 // pred_region
      %s1160 = ssub.s32 128, 128
      %1161 = vsyncadd [#allocation4], %s1160
      %s1163 = sshll.u32 [#allocation8], 4
      %s1164 = int_to_ptr.vmem [resolvable:$true] %s1163
      %1166 = dma.vmem_to_hbm [thread:$0]  %s1164, 128, %s5, [#allocation4]
    $region37: #{tpu_custom_call.1} parent=1 // pred_fallthru
      _
    // Predicated region
    $region38: #{tpu_custom_call.1} parent=1 // pred_check
      _
    $region39: #{tpu_custom_call.1} parent=1 // pred_check_branch
      %1168 = sbr.rel (0) target = $region41
    $region40: #{tpu_custom_call.1} parent=1 // pred_region
      %1169 = dma.done [#allocation4], 128
    $region41: #{tpu_custom_call.1} parent=1 // pred_fallthru
      _
    %1170 = vsyncpa [#allocation3], 1
    %1171 = vsyncpa [#allocation6], 1
    %1172 = vsyncpa [#allocation4], 1

</llo_original>
